<compile_context>
chip_gen: v7x
topology: tpu7x:2x2x1
jax: 0.10.0
libtpu: 0.0.40
codegen_flags: <defaults>
</compile_context>

<pallas_src>
import jax
import jax.numpy as jnp
from jax.experimental import pallas as pl
from jax.experimental.pallas import tpu as pltpu

LANE = 128


def _round_up(x, m):
    return (x + m - 1) // m * m


# ----------------------------- Pallas kernel ------------------------------- #

def _gcn_fused_kernel(res_ref, a_ref, x_ref, w_ref, b_ref, o_ref):
    """All layers fused; grid axis 0 = layer index (sequential, "arbitrary").

    res_ref : SMEM [L] int32       per-layer residual flag (scalar prefetch)
    a_ref   : VMEM [Np, Np] bf16   normalized adjacency (resident)
    x_ref   : VMEM [Np, Fp] f32    input node features (resident)
    w_ref   : VMEM [Fp, Fp] bf16   this layer's weight (leading dim squeezed)
    b_ref   : VMEM [1, Fp]  f32    this layer's bias   (leading dim squeezed)
    o_ref   : VMEM [Np, Fp] f32    output block; constant index_map => resident
                                   across layers, doubles as the H accumulator
    """
    l = pl.program_id(0)

    @pl.when(l == 0)
    def _():
        o_ref[...] = x_ref[...]          # seed the resident f32 accumulator

    h = o_ref[...]                       # previous layer's H (f32)

    # Feature transform, then neighborhood aggregation (normalized adjacency
    # already folds both D^{-1/2} factors).  bf16 MXU inputs, f32 accumulate.
    hw = jnp.dot(h.astype(jnp.bfloat16), w_ref[...],
                 preferred_element_type=jnp.float32)
    agg = jnp.dot(a_ref[...], hw.astype(jnp.bfloat16),
                  preferred_element_type=jnp.float32)
    out = jnp.maximum(agg + b_ref[...], 0.0)     # bias + ReLU, f32 epilogue

    # Post-activation residual, gated per layer by an SMEM scalar flag.
    # Conditional write — no full-tile multiply-add on non-residual layers.
    @pl.when(res_ref[l] != 0)
    def _():
        o_ref[...] = out + h

    @pl.when(res_ref[l] == 0)
    def _():
        o_ref[...] = out


# --------------------------- VMEM budget (per gen) -------------------------- #

def _vmem_budget():
    """Generation-aware (vmem_limit_bytes, usable_resident_budget_bytes)."""
    try:
        cap = int(pltpu.get_tpu_info().vmem_capacity_bytes)
    except Exception:
        try:
            kind = jax.devices()[0].device_kind.lower()
            cap = (64 if "v7" in kind else 128) * 1024 * 1024
        except Exception:
            cap = 64 * 1024 * 1024                       # conservative default
    if cap <= 64 * 1024 * 1024:        # v7x: 64 MiB per TensorCore
        limit = 52 * 1024 * 1024       # leave headroom for compiler scratch
    else:                              # v5e / v6e: 128 MiB
        limit = 100 * 1024 * 1024
    guard = limit - 6 * 1024 * 1024    # slack for compiler temporaries
    return limit, guard


# ------------------------------- wrapper ------------------------------------ #

def gcn_forward(a_norm, x, weights, biases, residual):
    """Mirrors GCN.forward: sequential GraphConv layers (ReLU), residual only
    when the layer preserves the feature width.

    a_norm : [N, N] normalized adjacency; weights[i]: [Fin_i, Fout_i];
    biases[i]: [1, Fout_i].  Returns [N, Fout_last] (float32).
    """
    n, fin = x.shape
    num_layers = len(weights)
    f_out_last = weights[-1].shape[1]

    # Pad node / feature dims to 128 lanes (see padding note above).
    n_pad = _round_up(n, LANE)
    f_pad = _round_up(max([fin] + [w.shape[1] for w in weights]), LANE)

    a_p = jnp.zeros((n_pad, n_pad), jnp.float32).at[:n, :n].set(a_norm)
    a_p = a_p.astype(jnp.bfloat16)                        # MXU operand
    x_p = jnp.zeros((n_pad, f_pad), jnp.float32).at[:n, :fin].set(x)

    w_stack = jnp.zeros((num_layers, f_pad, f_pad), jnp.float32)
    b_stack = jnp.zeros((num_layers, 1, f_pad), jnp.float32)
    res_flags = []
    cur_feats = fin
    for i, (w, b) in enumerate(zip(weights, biases)):
        wi, wo = w.shape
        w_stack = w_stack.at[i, :wi, :wo].set(w)
        b_stack = b_stack.at[i, :, :wo].set(b.reshape(1, -1))
        res_flags.append(1 if (residual and wo == cur_feats) else 0)
        cur_feats = wo
    w_stack = w_stack.astype(jnp.bfloat16)                # MXU operand
    res_flags = jnp.asarray(res_flags, dtype=jnp.int32)

    vmem_limit, vmem_guard = _vmem_budget()

    def run(single_buffer_resident):
        resident_bufs = 1 if single_buffer_resident else 2
        # Actual VMEM footprint: resident A (bf16) + X (f32) + output/H (f32)
        # + double-buffered per-layer W (bf16) and b (f32).
        vmem_bytes = (resident_bufs * (n_pad * n_pad * 2 + n_pad * f_pad * 4)
                      + n_pad * f_pad * 4
                      + 2 * (f_pad * f_pad * 2 + f_pad * 4))
        if vmem_bytes > vmem_guard:
            # Large-N regime needs a row-tiled (parallel rows, arbitrary
            # layers) grid that streams A and splits the A @ (H W) matmul
            # across TensorCores; not needed at these sizes.
            raise ValueError(
                "graph too large for the fused resident-adjacency kernel: "
                f"needs ~{vmem_bytes / 2**20:.1f} MiB VMEM, budget "
                f"{vmem_guard / 2**20:.1f} MiB")

        def resident_spec(shape):
            index_map = lambda l, res: (0, 0)
            if single_buffer_resident:
                return pl.BlockSpec(shape, index_map,
                                    pipeline_mode=pl.Buffered(1))
            return pl.BlockSpec(shape, index_map)

        grid_spec = pltpu.PrefetchScalarGridSpec(
            num_scalar_prefetch=1,
            grid=(num_layers,),
            in_specs=[
                resident_spec((n_pad, n_pad)),                          # A
                resident_spec((n_pad, f_pad)),                          # X
                pl.BlockSpec((None, f_pad, f_pad), lambda l, res: (l, 0, 0)),
                pl.BlockSpec((None, 1, f_pad), lambda l, res: (l, 0, 0)),
            ],
            out_specs=pl.BlockSpec((n_pad, f_pad), lambda l, res: (0, 0)),
        )
        out = pl.pallas_call(
            _gcn_fused_kernel,
            out_shape=jax.ShapeDtypeStruct((n_pad, f_pad), jnp.float32),
            grid_spec=grid_spec,
            compiler_params=pltpu.CompilerParams(
                dimension_semantics=("arbitrary",),   # layers are sequential
                vmem_limit_bytes=vmem_limit,
            ),
        )(res_flags, a_p, x_p, w_stack, b_stack)
        return jax.block_until_ready(out)

    try:
        out_p = run(single_buffer_resident=True)
    except ValueError:
        raise
    except Exception:
        # pl.Buffered(1) not supported by this jax build: fall back to the
        # default double-buffered pipeline (identical semantics, more VMEM).
        out_p = run(single_buffer_resident=False)

    return out_p[:n, :f_out_last]


# ------------------------------ GCN params ---------------------------------- #

def init_gcn_params(key, input_size, hidden_size, layers):
    """Xavier-uniform weights (DGL GraphConv init) and small random biases
    (non-zero to exercise the bias-broadcast path)."""
    weights, biases = [], []
    fin = input_size
    for _ in range(layers):
        key, wk, bk = jax.random.split(key, 3)
        limit = (6.0 / (fin + hidden_size)) ** 0.5
        w = jax.random.uniform(wk, (fin, hidden_size), dtype=jnp.float32,
                               minval=-limit, maxval=limit)
        b = 0.1 * jax.random.normal(bk, (1, hidden_size), dtype=jnp.float32)
        weights.append(w)
        biases.append(b)
        fin = hidden_size
    return weights, biases


def normalize_adjacency(adj):
    """A_norm = D_in^{-1/2} A^T D_out^{-1/2}, degrees clamped to >= 1
    (DGL GraphConv norm='both')."""
    deg_out = jnp.clip(adj.sum(axis=1), 1.0, None)   # out-degree of sources
    deg_in = jnp.clip(adj.sum(axis=0), 1.0, None)    # in-degree of destinations
    return (deg_in[:, None] ** -0.5) * adj.T * (deg_out[None, :] ** -0.5)


# --------------------------------- main -------------------------------------- #

if __name__ == "__main__":
    key = jax.random.PRNGKey(0)

    num_nodes = 16
    input_size = 32
    hidden_size = 32
    layers = 2
    residual = 1

    key, k_adj, k_x, k_params = jax.random.split(key, 4)

    # Random symmetric graph with self-loops (dense adjacency, no edge weights).
    a_raw = (jax.random.uniform(k_adj, (num_nodes, num_nodes)) < 0.3).astype(jnp.float32)
    adj = jnp.maximum(a_raw, a_raw.T)
    adj = jnp.maximum(adj, jnp.eye(num_nodes, dtype=jnp.float32))
    a_norm = normalize_adjacency(adj)

    # Node features.
    x = jax.random.normal(k_x, (num_nodes, input_size), dtype=jnp.float32)

    weights, biases = init_gcn_params(k_params, input_size, hidden_size, layers)

    out = gcn_forward(a_norm, x, weights, biases, residual)
    out = jax.block_until_ready(out)

    # Reference 1: module semantics with the kernel's numerics (bf16 matmul
    # inputs, f32 accumulation) — tight check of the kernel plumbing.
    # Reference 2: pure f32 module semantics — loose check (bf16 MXU rounding).
    def reference(bf16_matmul):
        h = x
        for w, b in zip(weights, biases):
            if bf16_matmul:
                hw = jnp.dot(h.astype(jnp.bfloat16), w.astype(jnp.bfloat16),
                             preferred_element_type=jnp.float32)
                agg = jnp.dot(a_norm.astype(jnp.bfloat16),
                              hw.astype(jnp.bfloat16),
                              preferred_element_type=jnp.float32)
            else:
                agg = a_norm @ (h @ w)
            nxt = jnp.maximum(agg + b, 0.0)
            if residual and nxt.shape[-1] == h.shape[-1]:
                nxt = nxt + h
            h = nxt
        return h

    ref_bf16 = reference(True)
    ref_f32 = reference(False)

    assert out.shape == ref_bf16.shape
    assert jnp.allclose(out, ref_bf16, atol=2e-3, rtol=2e-3), \
        float(jnp.max(jnp.abs(out - ref_bf16)))
    assert jnp.allclose(out, ref_f32, atol=1e-1, rtol=1e-1), \
        float(jnp.max(jnp.abs(out - ref_f32)))

    print("KERNEL_OK")
</pallas_src>

<mosaic_0001>
module attributes {stable_mosaic.version = 11 : i64} {
  func.func @_gcn_fused_kernel(%arg0: i32, %arg1: memref<2xi32, #tpu.memory_space<smem>>, %arg2: memref<128x128xbf16, #tpu.memory_space<vmem>>, %arg3: memref<128x128xf32, #tpu.memory_space<vmem>>, %arg4: memref<1x128x128xbf16, #tpu.memory_space<vmem>>, %arg5: memref<1x1x128xf32, #tpu.memory_space<vmem>>, %arg6: memref<128x128xf32, #tpu.memory_space<vmem>>) attributes {dimension_semantics = [#tpu.dimension_semantics<arbitrary>], iteration_bounds = array<i64: 2>, scalar_prefetch = 1 : i64, scratch_operands = 0 : i64, tpu.core_type = #tpu.core_type<tc>, window_params = [{pipeline_mode = #tpu.pipeline_mode<synchronous>, transform_indices = @transform_0, window_bounds = array<i64: 128, 128>}, {pipeline_mode = #tpu.pipeline_mode<synchronous>, transform_indices = @transform_1, window_bounds = array<i64: 128, 128>}, {transform_indices = @transform_2, window_bounds = array<i64: 1, 128, 128>}, {transform_indices = @transform_3, window_bounds = array<i64: 1, 1, 128>}, {pipeline_mode = #tpu.pipeline_mode<synchronous>, transform_indices = @transform_4, window_bounds = array<i64: 128, 128>}]} {
    %c0_i32 = arith.constant 0 : i32
    %0 = arith.cmpi eq, %arg0, %c0_i32 : i32
    %1 = arith.extui %0 : i1 to i32
    %c0_i32_0 = arith.constant 0 : i32
    %2 = arith.cmpi ne, %1, %c0_i32_0 : i32
    scf.if %2 {
      %c0_16 = arith.constant 0 : index
      %c0_17 = arith.constant 0 : index
      %27 = vector.load %arg3[%c0_16, %c0_17] : memref<128x128xf32, #tpu.memory_space<vmem>>, vector<128x128xf32>
      %c0_18 = arith.constant 0 : index
      %c0_19 = arith.constant 0 : index
      %28 = vector.load %arg6[%c0_18, %c0_19] : memref<128x128xf32, #tpu.memory_space<vmem>>, vector<128x128xf32>
      tpu.vector_store %arg6[%c0_18, %c0_19], %27 {strides = array<i32>} : memref<128x128xf32, #tpu.memory_space<vmem>>, vector<128x128xf32>,
    } else {
    }
    %c0 = arith.constant 0 : index
    %c0_1 = arith.constant 0 : index
    %3 = vector.load %arg6[%c0, %c0_1] : memref<128x128xf32, #tpu.memory_space<vmem>>, vector<128x128xf32>
    %4 = arith.truncf %3 : vector<128x128xf32> to vector<128x128xbf16>
    %c0_2 = arith.constant 0 : index
    %c0_3 = arith.constant 0 : index
    %c0_4 = arith.constant 0 : index
    %5 = vector.load %arg4[%c0_2, %c0_3, %c0_4] : memref<1x128x128xbf16, #tpu.memory_space<vmem>>, vector<1x128x128xbf16>
    %6 = vector.shape_cast %5 : vector<1x128x128xbf16> to vector<128x128xbf16>
    %cst = arith.constant dense<0.000000e+00> : vector<128x128xf32>
    %7 = tpu.matmul %4, %6, %cst {dimension_numbers = #tpu.dot_dimension_numbers<[1], [0], [0], [1], [0, 0, 1, 1], [], []>} : vector<128x128xbf16>, vector<128x128xbf16>, vector<128x128xf32> -> vector<128x128xf32>
    %c0_5 = arith.constant 0 : index
    %c0_6 = arith.constant 0 : index
    %8 = vector.load %arg2[%c0_5, %c0_6] : memref<128x128xbf16, #tpu.memory_space<vmem>>, vector<128x128xbf16>
    %9 = arith.truncf %7 : vector<128x128xf32> to vector<128x128xbf16>
    %cst_7 = arith.constant dense<0.000000e+00> : vector<128x128xf32>
    %10 = tpu.matmul %8, %9, %cst_7 {dimension_numbers = #tpu.dot_dimension_numbers<[1], [0], [0], [1], [0, 0, 1, 1], [], []>} : vector<128x128xbf16>, vector<128x128xbf16>, vector<128x128xf32> -> vector<128x128xf32>
    %c0_8 = arith.constant 0 : index
    %c0_9 = arith.constant 0 : index
    %c0_10 = arith.constant 0 : index
    %11 = vector.load %arg5[%c0_8, %c0_9, %c0_10] : memref<1x1x128xf32, #tpu.memory_space<vmem>>, vector<1x1x128xf32>
    %12 = vector.shape_cast %11 : vector<1x1x128xf32> to vector<1x128xf32>
    %13 = vector.broadcast %12 : vector<1x128xf32> to vector<128x128xf32>
    %14 = arith.addf %10, %13 : vector<128x128xf32>
    %cst_11 = arith.constant 0.000000e+00 : f32
    %15 = vector.broadcast %cst_11 : f32 to vector<128x128xf32>
    %16 = arith.maximumf %14, %15 : vector<128x128xf32>
    %17 = arith.index_cast %arg0 : i32 to index
    %18 = memref.load %arg1[%17] : memref<2xi32, #tpu.memory_space<smem>>
    %c0_i32_12 = arith.constant 0 : i32
    %19 = arith.cmpi ne, %18, %c0_i32_12 : i32
    %20 = arith.extui %19 : i1 to i32
    %c0_i32_13 = arith.constant 0 : i32
    %21 = arith.cmpi ne, %20, %c0_i32_13 : i32
    scf.if %21 {
      %27 = arith.addf %16, %3 : vector<128x128xf32>
      %c0_16 = arith.constant 0 : index
      %c0_17 = arith.constant 0 : index
      %28 = vector.load %arg6[%c0_16, %c0_17] : memref<128x128xf32, #tpu.memory_space<vmem>>, vector<128x128xf32>
      tpu.vector_store %arg6[%c0_16, %c0_17], %27 {strides = array<i32>} : memref<128x128xf32, #tpu.memory_space<vmem>>, vector<128x128xf32>,
    } else {
    }
    %22 = arith.index_cast %arg0 : i32 to index
    %23 = memref.load %arg1[%22] : memref<2xi32, #tpu.memory_space<smem>>
    %c0_i32_14 = arith.constant 0 : i32
    %24 = arith.cmpi eq, %23, %c0_i32_14 : i32
    %25 = arith.extui %24 : i1 to i32
    %c0_i32_15 = arith.constant 0 : i32
    %26 = arith.cmpi ne, %25, %c0_i32_15 : i32
    scf.if %26 {
      %c0_16 = arith.constant 0 : index
      %c0_17 = arith.constant 0 : index
      %27 = vector.load %arg6[%c0_16, %c0_17] : memref<128x128xf32, #tpu.memory_space<vmem>>, vector<128x128xf32>
      tpu.vector_store %arg6[%c0_16, %c0_17], %16 {strides = array<i32>} : memref<128x128xf32, #tpu.memory_space<vmem>>, vector<128x128xf32>,
    } else {
    }
    return
  }
  func.func @transform_0(%arg0: i32, %arg1: memref<2xi32, #tpu.memory_space<smem>>) -> (i32, i32) {
    %c0_i32 = arith.constant 0 : i32
    %c0_i32_0 = arith.constant 0 : i32
    %c0_i32_1 = arith.constant 0 : i32
    return %c0_i32, %c0_i32_0 : i32, i32
  }
  func.func @transform_1(%arg0: i32, %arg1: memref<2xi32, #tpu.memory_space<smem>>) -> (i32, i32) {
    %c0_i32 = arith.constant 0 : i32
    %c0_i32_0 = arith.constant 0 : i32
    %c0_i32_1 = arith.constant 0 : i32
    return %c0_i32, %c0_i32_0 : i32, i32
  }
  func.func @transform_2(%arg0: i32, %arg1: memref<2xi32, #tpu.memory_space<smem>>) -> (i32, i32, i32) {
    %c0_i32 = arith.constant 0 : i32
    %c0_i32_0 = arith.constant 0 : i32
    %c0_i32_1 = arith.constant 0 : i32
    return %arg0, %c0_i32, %c0_i32_0 : i32, i32, i32
  }
  func.func @transform_3(%arg0: i32, %arg1: memref<2xi32, #tpu.memory_space<smem>>) -> (i32, i32, i32) {
    %c0_i32 = arith.constant 0 : i32
    %c0_i32_0 = arith.constant 0 : i32
    %c0_i32_1 = arith.constant 0 : i32
    return %arg0, %c0_i32, %c0_i32_0 : i32, i32, i32
  }
  func.func @transform_4(%arg0: i32, %arg1: memref<2xi32, #tpu.memory_space<smem>>) -> (i32, i32) {
    %c0_i32 = arith.constant 0 : i32
    %c0_i32_0 = arith.constant 0 : i32
    %c0_i32_1 = arith.constant 0 : i32
    return %c0_i32, %c0_i32_0 : i32, i32
  }
}

module attributes {stable_mosaic.version = 11 : i64} {
  func.func @_gcn_fused_kernel(%arg0: i32, %arg1: memref<2xi32, #tpu.memory_space<smem>>, %arg2: memref<128x128xbf16, #tpu.memory_space<vmem>>, %arg3: memref<128x128xf32, #tpu.memory_space<vmem>>, %arg4: memref<1x128x128xbf16, #tpu.memory_space<vmem>>, %arg5: memref<1x1x128xf32, #tpu.memory_space<vmem>>, %arg6: memref<128x128xf32, #tpu.memory_space<vmem>>) attributes {dimension_semantics = [#tpu.dimension_semantics<arbitrary>], iteration_bounds = array<i64: 2>, scalar_prefetch = 1 : i64, scratch_operands = 0 : i64, tpu.core_type = #tpu.core_type<tc>, window_params = [{pipeline_mode = #tpu.pipeline_mode<synchronous>, transform_indices = @transform_0, window_bounds = array<i64: 128, 128>}, {pipeline_mode = #tpu.pipeline_mode<synchronous>, transform_indices = @transform_1, window_bounds = array<i64: 128, 128>}, {transform_indices = @transform_2, window_bounds = array<i64: 1, 128, 128>}, {transform_indices = @transform_3, window_bounds = array<i64: 1, 1, 128>}, {pipeline_mode = #tpu.pipeline_mode<synchronous>, transform_indices = @transform_4, window_bounds = array<i64: 128, 128>}]} {
    %c0_i32 = arith.constant 0 : i32
    %0 = arith.cmpi eq, %arg0, %c0_i32 : i32
    %1 = arith.extui %0 : i1 to i32
    %c0_i32_0 = arith.constant 0 : i32
    %2 = arith.cmpi ne, %1, %c0_i32_0 : i32
    scf.if %2 {
      %c0_16 = arith.constant 0 : index
      %c0_17 = arith.constant 0 : index
      %27 = vector.load %arg3[%c0_16, %c0_17] : memref<128x128xf32, #tpu.memory_space<vmem>>, vector<128x128xf32>
      %c0_18 = arith.constant 0 : index
      %c0_19 = arith.constant 0 : index
      %28 = vector.load %arg6[%c0_18, %c0_19] : memref<128x128xf32, #tpu.memory_space<vmem>>, vector<128x128xf32>
      tpu.vector_store %arg6[%c0_18, %c0_19], %27 {strides = array<i32>} : memref<128x128xf32, #tpu.memory_space<vmem>>, vector<128x128xf32>,
    } else {
    }
    %c0 = arith.constant 0 : index
    %c0_1 = arith.constant 0 : index
    %3 = vector.load %arg6[%c0, %c0_1] : memref<128x128xf32, #tpu.memory_space<vmem>>, vector<128x128xf32>
    %4 = arith.truncf %3 : vector<128x128xf32> to vector<128x128xbf16>
    %c0_2 = arith.constant 0 : index
    %c0_3 = arith.constant 0 : index
    %c0_4 = arith.constant 0 : index
    %5 = vector.load %arg4[%c0_2, %c0_3, %c0_4] : memref<1x128x128xbf16, #tpu.memory_space<vmem>>, vector<1x128x128xbf16>
    %6 = vector.shape_cast %5 : vector<1x128x128xbf16> to vector<128x128xbf16>
    %cst = arith.constant dense<0.000000e+00> : vector<128x128xf32>
    %7 = tpu.matmul %4, %6, %cst {dimension_numbers = #tpu.dot_dimension_numbers<[1], [0], [0], [1], [0, 0, 1, 1], [], []>} : vector<128x128xbf16>, vector<128x128xbf16>, vector<128x128xf32> -> vector<128x128xf32>
    %c0_5 = arith.constant 0 : index
    %c0_6 = arith.constant 0 : index
    %8 = vector.load %arg2[%c0_5, %c0_6] : memref<128x128xbf16, #tpu.memory_space<vmem>>, vector<128x128xbf16>
    %9 = arith.truncf %7 : vector<128x128xf32> to vector<128x128xbf16>
    %cst_7 = arith.constant dense<0.000000e+00> : vector<128x128xf32>
    %10 = tpu.matmul %8, %9, %cst_7 {dimension_numbers = #tpu.dot_dimension_numbers<[1], [0], [0], [1], [0, 0, 1, 1], [], []>} : vector<128x128xbf16>, vector<128x128xbf16>, vector<128x128xf32> -> vector<128x128xf32>
    %c0_8 = arith.constant 0 : index
    %c0_9 = arith.constant 0 : index
    %c0_10 = arith.constant 0 : index
    %11 = vector.load %arg5[%c0_8, %c0_9, %c0_10] : memref<1x1x128xf32, #tpu.memory_space<vmem>>, vector<1x1x128xf32>
    %12 = vector.shape_cast %11 : vector<1x1x128xf32> to vector<1x128xf32>
    %13 = vector.broadcast %12 : vector<1x128xf32> to vector<128x128xf32>
    %14 = arith.addf %10, %13 : vector<128x128xf32>
    %cst_11 = arith.constant 0.000000e+00 : f32
    %15 = vector.broadcast %cst_11 : f32 to vector<128x128xf32>
    %16 = arith.maximumf %14, %15 : vector<128x128xf32>
    %17 = arith.index_cast %arg0 : i32 to index
    %18 = memref.load %arg1[%17] : memref<2xi32, #tpu.memory_space<smem>>
    %c0_i32_12 = arith.constant 0 : i32
    %19 = arith.cmpi ne, %18, %c0_i32_12 : i32
    %20 = arith.extui %19 : i1 to i32
    %c0_i32_13 = arith.constant 0 : i32
    %21 = arith.cmpi ne, %20, %c0_i32_13 : i32
    scf.if %21 {
      %27 = arith.addf %16, %3 : vector<128x128xf32>
      %c0_16 = arith.constant 0 : index
      %c0_17 = arith.constant 0 : index
      %28 = vector.load %arg6[%c0_16, %c0_17] : memref<128x128xf32, #tpu.memory_space<vmem>>, vector<128x128xf32>
      tpu.vector_store %arg6[%c0_16, %c0_17], %27 {strides = array<i32>} : memref<128x128xf32, #tpu.memory_space<vmem>>, vector<128x128xf32>,
    } else {
    }
    %22 = arith.index_cast %arg0 : i32 to index
    %23 = memref.load %arg1[%22] : memref<2xi32, #tpu.memory_space<smem>>
    %c0_i32_14 = arith.constant 0 : i32
    %24 = arith.cmpi eq, %23, %c0_i32_14 : i32
    %25 = arith.extui %24 : i1 to i32
    %c0_i32_15 = arith.constant 0 : i32
    %26 = arith.cmpi ne, %25, %c0_i32_15 : i32
    scf.if %26 {
      %c0_16 = arith.constant 0 : index
      %c0_17 = arith.constant 0 : index
      %27 = vector.load %arg6[%c0_16, %c0_17] : memref<128x128xf32, #tpu.memory_space<vmem>>, vector<128x128xf32>
      tpu.vector_store %arg6[%c0_16, %c0_17], %16 {strides = array<i32>} : memref<128x128xf32, #tpu.memory_space<vmem>>, vector<128x128xf32>,
    } else {
    }
    return
  }
  func.func @transform_0(%arg0: i32, %arg1: memref<2xi32, #tpu.memory_space<smem>>) -> (i32, i32) {
    %c0_i32 = arith.constant 0 : i32
    %c0_i32_0 = arith.constant 0 : i32
    %c0_i32_1 = arith.constant 0 : i32
    return %c0_i32, %c0_i32_0 : i32, i32
  }
  func.func @transform_1(%arg0: i32, %arg1: memref<2xi32, #tpu.memory_space<smem>>) -> (i32, i32) {
    %c0_i32 = arith.constant 0 : i32
    %c0_i32_0 = arith.constant 0 : i32
    %c0_i32_1 = arith.constant 0 : i32
    return %c0_i32, %c0_i32_0 : i32, i32
  }
  func.func @transform_2(%arg0: i32, %arg1: memref<2xi32, #tpu.memory_space<smem>>) -> (i32, i32, i32) {
    %c0_i32 = arith.constant 0 : i32
    %c0_i32_0 = arith.constant 0 : i32
    %c0_i32_1 = arith.constant 0 : i32
    return %arg0, %c0_i32, %c0_i32_0 : i32, i32, i32
  }
  func.func @transform_3(%arg0: i32, %arg1: memref<2xi32, #tpu.memory_space<smem>>) -> (i32, i32, i32) {
    %c0_i32 = arith.constant 0 : i32
    %c0_i32_0 = arith.constant 0 : i32
    %c0_i32_1 = arith.constant 0 : i32
    return %arg0, %c0_i32, %c0_i32_0 : i32, i32, i32
  }
  func.func @transform_4(%arg0: i32, %arg1: memref<2xi32, #tpu.memory_space<smem>>) -> (i32, i32) {
    %c0_i32 = arith.constant 0 : i32
    %c0_i32_0 = arith.constant 0 : i32
    %c0_i32_1 = arith.constant 0 : i32
    return %c0_i32, %c0_i32_0 : i32, i32
  }
}

</mosaic_0001>

<llo_original>
// kernel: tpu_custom_call.1
$region0: #{tpu_custom_call.1}
  #allocation0 [shape = 'u32[]', space=smem, size = 0x4, offset = 0x4, fixed_abs, tag = 'smem constant byte address 0x4 - core index']
  #allocation1 [shape = 'u32[144,128]{1,0:T(1,128)}', space=vmem, size = 0x12000, scoped, tag = 'internal scratch']
  #allocation2 [shape = 's32[1]{0}', space=sflag, size = 0x4, scoped, tag = 'scoped memory for tpu_custom_call.1']
  #allocation3 [shape = 'u8[512]{0}', space=smem, size = 0x200, scoped, tag = 'prefetched SMEM operand 0']
  %s0 = inlined_call_operand.hbm [shape: s32[2], index: 0, kind: input, shape index: {}]
  %s1 = inlined_call_operand.hbm [shape: bf16[128,128], index: 1, kind: input, shape index: {}]
  %s2 = inlined_call_operand.hbm [shape: f32[128,128], index: 2, kind: input, shape index: {}]
  %s3 = inlined_call_operand.hbm [shape: bf16[2,128,128], index: 3, kind: input, shape index: {}]
  %s4 = inlined_call_operand.hbm [shape: f32[2,1,128], index: 4, kind: input, shape index: {}]
  %s5 = inlined_call_operand.hbm [shape: f32[128,128], index: 5, kind: output, shape index: {}]
  %s6 = sld [smem:[#allocation0]]
  $region77: #{tpu_custom_call.1} parent=0
    _
  %s8 = ssub.s32 1, %s6
  %s9 = scalar_select 0, %s8, %s6
  %11 = dma.hbm_to_smem %s0, 16, [#allocation3], [#allocation2]
  %12 = dma.done [#allocation2], 16
  %13 = sfence
  $region1: #{tpu_custom_call.1} parent=0
    #allocation4 [shape = 'u8[32768]{0}', space=vmem, size = 0x8000, scoped, tag = 'input window, operand 1, single buffered']
    #allocation5 [shape = 's32[2]{0}', space=sflag, size = 0x8, scoped, tag = 'scoped memory for tpu_custom_call.1']
    #allocation6 [shape = 's32[2]{0}', space=sflag, size = 0x8, scoped, tag = 'scoped memory for tpu_custom_call.1']
    #allocation7 [shape = 'u8[65536]{0}', space=vmem, size = 0x10000, scoped, tag = 'input window, operand 2, single buffered']
    #allocation8 [shape = 's32[1]{0}', space=sflag, size = 0x4, scoped, tag = 'scoped memory for tpu_custom_call.1']
    #allocation9 [shape = 'u8[65536]{0}', space=vmem, size = 0x10000, scoped, tag = 'input window, operand 3']
    #allocation10 [shape = 'u8[1024]{0}', space=vmem, size = 0x400, scoped, tag = 'input window, operand 4']
    #allocation11 [shape = 'u8[65536]{0}', space=vmem, size = 0x10000, scoped, tag = 'output window, operand 0, single buffered']
    %14 = vsyncpa [#allocation5], 0
    %15 = vsyncpa [#allocation8], 0
    %16 = vsyncpa [#allocation6], 0
    loop: start=0, step=1, limit=4
    $region2: #{tpu_custom_call.1} parent=1 // loop_pre_header
      _
    $region3: #{tpu_custom_call.1} parent=1 // loop_header
      %s18 = sphi 0, %s22
      %p19 = scmp.ge.s32.totalorder %s18, 4
      %s26 = sphi 0, %s26
      %s28 = sphi 0, %s26
      %s29 = sphi 0, %s28
      %s43 = sphi 0, %s29
      %s47 = sphi 0, %s47
      %s49 = sphi 0, %s47
      %s50 = sphi 0, %s49
      %s64 = sphi 0, %s50
      %s70 = sphi 0, %s72
      %s73 = sphi 0, %s70
      %s74 = sphi 0, %s73
      %s90 = sphi 0, %s74
      %s96 = sphi 0, %s98
      %s99 = sphi 0, %s96
      %s100 = sphi 0, %s99
      %s116 = sphi 0, %s100
      %s120 = sphi 0, %s120
      %s122 = sphi 0, %s120
      %s123 = sphi 0, %s122
      %s137 = sphi 0, %s123
    $region4: #{tpu_custom_call.1} parent=1 // loop_header_branch
      %21 = sbr.rel (%p19) target = $region8
    $region5: #{tpu_custom_call.1} parent=1 // loop_body
      %s23 = ssub.s32 %s18, 1
      %s24 = ssub.s32 %s18, 2
      %s25 = sadd.s32 %s18, 1
      %s27 = sadd.s32 %s26, 1
      %p30 = scmp.eq.s32.totalorder %s18, 1
      %p31 = scmp.ne.s32.totalorder %s26, %s28
      %p32 = scmp.eq.s32.totalorder %s18, 0
      %p33 = por %p31, %p32
      %p34 = scmp.ne.s32.totalorder %s26, %s28
      %p35 = scmp.eq.s32.totalorder %s23, 1
      %p36 = por %p34, %p35
      %p37 = scmp.ne.s32.totalorder %s28, %s29
      %p38 = scmp.eq.s32.totalorder %s23, 0
      %p39 = por %p37, %p38
      %p40 = scmp.ne.s32.totalorder %s28, %s29
      %p41 = scmp.eq.s32.totalorder %s24, 1
      %p42 = por %p40, %p41
      %p44 = scmp.ne.s32.totalorder %s29, %s43
      %p45 = scmp.eq.s32.totalorder %s24, 0
      %p46 = por %p44, %p45
      %s48 = sadd.s32 %s47, 1
      %p51 = scmp.eq.s32.totalorder %s18, 1
      %p52 = scmp.ne.s32.totalorder %s47, %s49
      %p53 = scmp.eq.s32.totalorder %s18, 0
      %p54 = por %p52, %p53
      %p55 = scmp.ne.s32.totalorder %s47, %s49
      %p56 = scmp.eq.s32.totalorder %s23, 1
      %p57 = por %p55, %p56
      %p58 = scmp.ne.s32.totalorder %s49, %s50
      %p59 = scmp.eq.s32.totalorder %s23, 0
      %p60 = por %p58, %p59
      %p61 = scmp.ne.s32.totalorder %s49, %s50
      %p62 = scmp.eq.s32.totalorder %s24, 1
      %p63 = por %p61, %p62
      %p65 = scmp.ne.s32.totalorder %s50, %s64
      %p66 = scmp.eq.s32.totalorder %s24, 0
      %p67 = por %p65, %p66
      %s68 = ssub.s32 %s18, %s25
      %p69 = scmp.eq.s32.totalorder %s68, 0
      %s71 = sadd.s32 %s70, 1
      %s72 = scalar_select %p69, %s70, %s71
      %p75 = pneg %p69
      %p76 = scmp.eq.s32.totalorder %s18, 1
      %p77 = por %p75, %p76
      %p78 = scmp.ne.s32.totalorder %s70, %s73
      %p79 = scmp.eq.s32.totalorder %s18, 0
      %p80 = por %p78, %p79
      %p81 = scmp.ne.s32.totalorder %s70, %s73
      %p82 = scmp.eq.s32.totalorder %s23, 1
      %p83 = por %p81, %p82
      %p84 = scmp.ne.s32.totalorder %s73, %s74
      %p85 = scmp.eq.s32.totalorder %s23, 0
      %p86 = por %p84, %p85
      %p87 = scmp.ne.s32.totalorder %s73, %s74
      %p88 = scmp.eq.s32.totalorder %s24, 1
      %p89 = por %p87, %p88
      %p91 = scmp.ne.s32.totalorder %s74, %s90
      %p92 = scmp.eq.s32.totalorder %s24, 0
      %p93 = por %p91, %p92
      %s94 = ssub.s32 %s18, %s25
      %p95 = scmp.eq.s32.totalorder %s94, 0
      %s97 = sadd.s32 %s96, 1
      %s98 = scalar_select %p95, %s96, %s97
      %p101 = pneg %p95
      %p102 = scmp.eq.s32.totalorder %s18, 1
      %p103 = por %p101, %p102
      %p104 = scmp.ne.s32.totalorder %s96, %s99
      %p105 = scmp.eq.s32.totalorder %s18, 0
      %p106 = por %p104, %p105
      %p107 = scmp.ne.s32.totalorder %s96, %s99
      %p108 = scmp.eq.s32.totalorder %s23, 1
      %p109 = por %p107, %p108
      %p110 = scmp.ne.s32.totalorder %s99, %s100
      %p111 = scmp.eq.s32.totalorder %s23, 0
      %p112 = por %p110, %p111
      %p113 = scmp.ne.s32.totalorder %s99, %s100
      %p114 = scmp.eq.s32.totalorder %s24, 1
      %p115 = por %p113, %p114
      %p117 = scmp.ne.s32.totalorder %s100, %s116
      %p118 = scmp.eq.s32.totalorder %s24, 0
      %p119 = por %p117, %p118
      %s121 = sadd.s32 %s120, 1
      %p124 = scmp.eq.s32.totalorder %s18, 1
      %p125 = scmp.ne.s32.totalorder %s120, %s122
      %p126 = scmp.eq.s32.totalorder %s18, 0
      %p127 = por %p125, %p126
      %p128 = scmp.ne.s32.totalorder %s120, %s122
      %p129 = scmp.eq.s32.totalorder %s23, 1
      %p130 = por %p128, %p129
      %p131 = scmp.ne.s32.totalorder %s122, %s123
      %p132 = scmp.eq.s32.totalorder %s23, 0
      %p133 = por %p131, %p132
      %p134 = scmp.ne.s32.totalorder %s122, %s123
      %p135 = scmp.eq.s32.totalorder %s24, 1
      %p136 = por %p134, %p135
      %p138 = scmp.ne.s32.totalorder %s123, %s137
      %p139 = scmp.eq.s32.totalorder %s24, 0
      %p140 = por %p138, %p139
      %p141 = scmp.le.s32.totalorder 1, %s18
      %p142 = scmp.lt.s32.totalorder %s18, 3
      %p143 = pnand %p141, %p142
      %p144 = pneg %p143
      // Predicated region
      $region9: #{tpu_custom_call.1} parent=5 // pred_check
        _
      $region10: #{tpu_custom_call.1} parent=5 // pred_check_branch
        %146 = sbr.rel (%p143) target = $region12
      $region11: #{tpu_custom_call.1} parent=5 // pred_region
        %s147 = ssub.s32 %s18, 1
        // Predicated region
        $region13: #{tpu_custom_call.1} parent=11 // pred_check
          %p148 = pneg %p39
        $region14: #{tpu_custom_call.1} parent=11 // pred_check_branch
          %150 = sbr.rel (%p148) target = $region16
        $region15: #{tpu_custom_call.1} parent=11 // pred_region
          %s152 = ssub.s32 1024, 1024
          %153 = vsyncadd [#allocation5], %s152
          %s154 = sshll.u32 [#allocation4], 4
          %s155 = int_to_ptr.vmem [resolvable:$true] %s154
          %160 = dma.hbm_to_vmem [thread:$0]  %s1, 1024, %s155, [#allocation5], 64, 64, 4
        $region16: #{tpu_custom_call.1} parent=11 // pred_fallthru
          _
        // Predicated region
        $region17: #{tpu_custom_call.1} parent=11 // pred_check
          %p161 = pneg %p60
        $region18: #{tpu_custom_call.1} parent=11 // pred_check_branch
          %163 = sbr.rel (%p161) target = $region20
        $region19: #{tpu_custom_call.1} parent=11 // pred_region
          %s165 = ssub.s32 2048, 2048
          %166 = vsyncadd [#allocation8], %s165
          %s167 = sshll.u32 [#allocation7], 4
          %s168 = int_to_ptr.vmem [resolvable:$true] %s167
          %173 = dma.hbm_to_vmem [thread:$0]  %s2, 2048, %s168, [#allocation8], 128, 128, 8
        $region20: #{tpu_custom_call.1} parent=11 // pred_fallthru
          _
      $region12: #{tpu_custom_call.1} parent=5 // pred_fallthru
        _
      %p174 = scmp.lt.s32.totalorder %s18, 2
      // Predicated region
      $region21: #{tpu_custom_call.1} parent=5 // pred_check
        %p175 = pneg %p174
      $region22: #{tpu_custom_call.1} parent=5 // pred_check_branch
        %177 = sbr.rel (%p175) target = $region24
      $region23: #{tpu_custom_call.1} parent=5 // pred_region
        // Predicated region
        $region25: #{tpu_custom_call.1} parent=23 // pred_check
          %p178 = pneg %p80
        $region26: #{tpu_custom_call.1} parent=23 // pred_check_branch
          %180 = sbr.rel (%p178) target = $region28
        $region27: #{tpu_custom_call.1} parent=23 // pred_region
          %s181 = sand.u32 %s18, 1
          %s182 = scalar_lea.sflag [#allocation5], %s181
          %s183 = sand.u32 %s70, 1
          %s184 = smul.addr %s183, 64
          %s185 = scalar_lea.vmem [#allocation9], %s184
          %s187 = ssub.s32 1024, 1024
          %188 = vsyncadd %s182, %s187
          %s189 = smul.addr %s18, 16
          %s190 = smul.addr %s189, 64
          %s191 = scalar_lea.hbm %s3, %s190
          %s192 = sshll.u32 %s185, 4
          %s193 = int_to_ptr.vmem [resolvable:$true] %s192
          %198 = dma.hbm_to_vmem [thread:$0]  %s191, 1024, %s193, %s182, 64, 64, 4
        $region28: #{tpu_custom_call.1} parent=23 // pred_fallthru
          _
        // Predicated region
        $region29: #{tpu_custom_call.1} parent=23 // pred_check
          %p199 = pneg %p106
        $region30: #{tpu_custom_call.1} parent=23 // pred_check_branch
          %201 = sbr.rel (%p199) target = $region32
        $region31: #{tpu_custom_call.1} parent=23 // pred_region
          %s202 = sand.u32 %s18, 1
          %s203 = scalar_lea.sflag [#allocation5], %s202
          %s204 = sand.u32 %s96, 1
          %s205 = scalar_lea.vmem [#allocation10], %s204
          %s207 = ssub.s32 16, 16
          %208 = vsyncadd %s203, %s207
          %s209 = smul.addr %s18, 16
          %s210 = scalar_lea.hbm %s4, %s209
          %s212 = sshll.u32 %s205, 4
          %s213 = int_to_ptr.vmem [resolvable:$true] %s212
          %215 = dma.hbm_to_vmem [thread:$0]  %s210, 16, %s213, %s203
        $region32: #{tpu_custom_call.1} parent=23 // pred_fallthru
          _
      $region24: #{tpu_custom_call.1} parent=5 // pred_fallthru
        _
      %p216 = scmp.le.s32.totalorder 1, %s18
      %p217 = scmp.lt.s32.totalorder %s18, 3
      %p218 = pnand %p216, %p217
      %p219 = pneg %p218
      // Predicated region
      $region33: #{tpu_custom_call.1} parent=5 // pred_check
        _
      $region34: #{tpu_custom_call.1} parent=5 // pred_check_branch
        %221 = sbr.rel (%p218) target = $region36
      $region35: #{tpu_custom_call.1} parent=5 // pred_region
        %s222 = ssub.s32 %s18, 1
        // Predicated region
        $region37: #{tpu_custom_call.1} parent=35 // pred_check
          %p223 = pneg %p39
        $region38: #{tpu_custom_call.1} parent=35 // pred_check_branch
          %225 = sbr.rel (%p223) target = $region40
        $region39: #{tpu_custom_call.1} parent=35 // pred_region
          %226 = dma.done [#allocation5], 1024
        $region40: #{tpu_custom_call.1} parent=35 // pred_fallthru
          _
        // Predicated region
        $region41: #{tpu_custom_call.1} parent=35 // pred_check
          %p227 = pneg %p60
        $region42: #{tpu_custom_call.1} parent=35 // pred_check_branch
          %229 = sbr.rel (%p227) target = $region44
        $region43: #{tpu_custom_call.1} parent=35 // pred_region
          %230 = dma.done [#allocation8], 2048
        $region44: #{tpu_custom_call.1} parent=35 // pred_fallthru
          _
        %s231 = sand.u32 %s23, 1
        %s232 = scalar_lea.sflag [#allocation5], %s231
        %s233 = sand.u32 %s73, 1
        %s234 = smul.addr %s233, 64
        %s235 = scalar_lea.vmem [#allocation9], %s234
        // Predicated region
        $region45: #{tpu_custom_call.1} parent=35 // pred_check
          %p236 = pneg %p86
        $region46: #{tpu_custom_call.1} parent=35 // pred_check_branch
          %238 = sbr.rel (%p236) target = $region48
        $region47: #{tpu_custom_call.1} parent=35 // pred_region
          %239 = dma.done %s232, 1024
        $region48: #{tpu_custom_call.1} parent=35 // pred_fallthru
          _
        %s240 = sand.u32 %s23, 1
        %s241 = scalar_lea.sflag [#allocation5], %s240
        %s242 = sand.u32 %s99, 1
        %s243 = scalar_lea.vmem [#allocation10], %s242
        // Predicated region
        $region49: #{tpu_custom_call.1} parent=35 // pred_check
          %p244 = pneg %p112
        $region50: #{tpu_custom_call.1} parent=35 // pred_check_branch
          %246 = sbr.rel (%p244) target = $region52
        $region51: #{tpu_custom_call.1} parent=35 // pred_region
          %247 = dma.done %s241, 16
        $region52: #{tpu_custom_call.1} parent=35 // pred_fallthru
          _
        %p248 = pneg %p39
        %p249 = pneg %p36
        %p250 = pneg %p60
        %p251 = pneg %p57
        %s252 = sand.u32 %s23, 1
        %s253 = scalar_lea.sflag [#allocation5], %s252
        %s254 = sand.u32 %s73, 1
        %s255 = smul.addr %s254, 64
        %s256 = scalar_lea.vmem [#allocation9], %s255
        %p257 = pneg %p86
        %p258 = pneg %p83
        %s259 = sand.u32 %s23, 1
        %s260 = scalar_lea.sflag [#allocation5], %s259
        %s261 = sand.u32 %s99, 1
        %s262 = scalar_lea.vmem [#allocation10], %s261
        %p263 = pneg %p112
        %p264 = pneg %p109
        %p265 = pneg %p133
        %p266 = pneg %p130
        %p268 = scmp.eq.s32.totalorder %s23, 0
        // Predicated region
        $region53: #{tpu_custom_call.1} parent=35 // pred_check
          %p269 = pneg %p268
        $region54: #{tpu_custom_call.1} parent=35 // pred_check_branch
          %271 = sbr.rel (%p269) target = $region56
        $region55: #{tpu_custom_call.1} parent=35 // pred_region
          %v272 = vld [vmem:[#allocation7] sm:$0xff]
          %v273 = vld [vmem:[#allocation7 + $0x8] sm:$0xff]
          %v274 = vld [vmem:[#allocation7 + $0x10] sm:$0xff]
          %v275 = vld [vmem:[#allocation7 + $0x18] sm:$0xff]
          %v276 = vld [vmem:[#allocation7 + $0x20] sm:$0xff]
          %v277 = vld [vmem:[#allocation7 + $0x28] sm:$0xff]
          %v278 = vld [vmem:[#allocation7 + $0x30] sm:$0xff]
          %v279 = vld [vmem:[#allocation7 + $0x38] sm:$0xff]
          %v280 = vld [vmem:[#allocation7 + $0x40] sm:$0xff]
          %v281 = vld [vmem:[#allocation7 + $0x48] sm:$0xff]
          %v282 = vld [vmem:[#allocation7 + $0x50] sm:$0xff]
          %v283 = vld [vmem:[#allocation7 + $0x58] sm:$0xff]
          %v284 = vld [vmem:[#allocation7 + $0x60] sm:$0xff]
          %v285 = vld [vmem:[#allocation7 + $0x68] sm:$0xff]
          %v286 = vld [vmem:[#allocation7 + $0x70] sm:$0xff]
          %v287 = vld [vmem:[#allocation7 + $0x78] sm:$0xff]
          %288 = vst [vmem:[#allocation11] sm:$0xff] %v272
          %289 = vst [vmem:[#allocation11 + $0x8] sm:$0xff] %v273
          %290 = vst [vmem:[#allocation11 + $0x10] sm:$0xff] %v274
          %291 = vst [vmem:[#allocation11 + $0x18] sm:$0xff] %v275
          %292 = vst [vmem:[#allocation11 + $0x20] sm:$0xff] %v276
          %293 = vst [vmem:[#allocation11 + $0x28] sm:$0xff] %v277
          %294 = vst [vmem:[#allocation11 + $0x30] sm:$0xff] %v278
          %295 = vst [vmem:[#allocation11 + $0x38] sm:$0xff] %v279
          %296 = vst [vmem:[#allocation11 + $0x40] sm:$0xff] %v280
          %297 = vst [vmem:[#allocation11 + $0x48] sm:$0xff] %v281
          %298 = vst [vmem:[#allocation11 + $0x50] sm:$0xff] %v282
          %299 = vst [vmem:[#allocation11 + $0x58] sm:$0xff] %v283
          %300 = vst [vmem:[#allocation11 + $0x60] sm:$0xff] %v284
          %301 = vst [vmem:[#allocation11 + $0x68] sm:$0xff] %v285
          %302 = vst [vmem:[#allocation11 + $0x70] sm:$0xff] %v286
          %303 = vst [vmem:[#allocation11 + $0x78] sm:$0xff] %v287
        $region56: #{tpu_custom_call.1} parent=35 // pred_fallthru
          _
        %v304 = vld [vmem:[#allocation11] sm:$0xff]
        %v305 = vld [vmem:[#allocation11 + $0x8] sm:$0xff]
        %v306 = vld [vmem:[#allocation11 + $0x10] sm:$0xff]
        %v307 = vld [vmem:[#allocation11 + $0x18] sm:$0xff]
        %v308 = vld [vmem:[#allocation11 + $0x20] sm:$0xff]
        %v309 = vld [vmem:[#allocation11 + $0x28] sm:$0xff]
        %v310 = vld [vmem:[#allocation11 + $0x30] sm:$0xff]
        %v311 = vld [vmem:[#allocation11 + $0x38] sm:$0xff]
        %v312 = vld [vmem:[#allocation11 + $0x40] sm:$0xff]
        %v313 = vld [vmem:[#allocation11 + $0x48] sm:$0xff]
        %v314 = vld [vmem:[#allocation11 + $0x50] sm:$0xff]
        %v315 = vld [vmem:[#allocation11 + $0x58] sm:$0xff]
        %v316 = vld [vmem:[#allocation11 + $0x60] sm:$0xff]
        %v317 = vld [vmem:[#allocation11 + $0x68] sm:$0xff]
        %v318 = vld [vmem:[#allocation11 + $0x70] sm:$0xff]
        %v319 = vld [vmem:[#allocation11 + $0x78] sm:$0xff]
        %v320 = vpack.c.bf16 %v305, %v304
        %v321 = vpack.c.bf16 %v307, %v306
        %v322 = vpack.c.bf16 %v309, %v308
        %v323 = vpack.c.bf16 %v311, %v310
        %v324 = vpack.c.bf16 %v313, %v312
        %v325 = vpack.c.bf16 %v315, %v314
        %v326 = vpack.c.bf16 %v317, %v316
        %v327 = vpack.c.bf16 %v319, %v318
        %v328 = vld [vmem:[%s235] sm:$0xf]
        %v329 = vld [vmem:[%s235 + $0x4] sm:$0xf]
        %v330 = vld [vmem:[%s235 + $0x8] sm:$0xf]
        %v331 = vld [vmem:[%s235 + $0xc] sm:$0xf]
        %v332 = vld [vmem:[%s235 + $0x10] sm:$0xf]
        %v333 = vld [vmem:[%s235 + $0x14] sm:$0xf]
        %v334 = vld [vmem:[%s235 + $0x18] sm:$0xf]
        %v335 = vld [vmem:[%s235 + $0x1c] sm:$0xf]
        %v336 = vld [vmem:[%s235 + $0x20] sm:$0xf]
        %v337 = vld [vmem:[%s235 + $0x24] sm:$0xf]
        %v338 = vld [vmem:[%s235 + $0x28] sm:$0xf]
        %v339 = vld [vmem:[%s235 + $0x2c] sm:$0xf]
        %v340 = vld [vmem:[%s235 + $0x30] sm:$0xf]
        %v341 = vld [vmem:[%s235 + $0x34] sm:$0xf]
        %v342 = vld [vmem:[%s235 + $0x38] sm:$0xf]
        %v343 = vld [vmem:[%s235 + $0x3c] sm:$0xf]
        %v360 = vunpack.c.l.b16 %v328
        %v361 = vunpack.c.l.b16 %v329
        %v362 = vunpack.c.l.b16 %v330
        %v363 = vunpack.c.l.b16 %v331
        %v364 = vunpack.c.l.b16 %v332
        %v365 = vunpack.c.l.b16 %v333
        %v366 = vunpack.c.l.b16 %v334
        %v367 = vunpack.c.l.b16 %v335
        %v368 = vunpack.c.l.b16 %v336
        %v369 = vunpack.c.l.b16 %v337
        %v370 = vunpack.c.l.b16 %v338
        %v371 = vunpack.c.l.b16 %v339
        %v372 = vunpack.c.l.b16 %v340
        %v373 = vunpack.c.l.b16 %v341
        %v374 = vunpack.c.l.b16 %v342
        %v375 = vunpack.c.l.b16 %v343
        %v376 = vpack.c.b16 %v361, %v360
        %v377 = vpack.c.b16 %v363, %v362
        %v378 = vpack.c.b16 %v365, %v364
        %v379 = vpack.c.b16 %v367, %v366
        %v380 = vpack.c.b16 %v369, %v368
        %v381 = vpack.c.b16 %v371, %v370
        %v382 = vpack.c.b16 %v373, %v372
        %v383 = vpack.c.b16 %v375, %v374
        %392 = vmatprep.subr.bf16.mxu0 0
        %393 = vmatpush1.bf16.msra.mxu0 %v376
        %394 = vmatprep.subr.bf16.mxu0 0
        %395 = vmatpush1.bf16.msra.mxu0 %v377
        %396 = vmatprep.subr.bf16.mxu0 0
        %397 = vmatpush1.bf16.msra.mxu0 %v378
        %398 = vmatprep.subr.bf16.mxu0 0
        %399 = vmatpush1.bf16.msra.mxu0 %v379
        %400 = vmatprep.subr.bf16.mxu0 0
        %401 = vmatpush1.bf16.msra.mxu0 %v380
        %402 = vmatprep.subr.bf16.mxu0 0
        %403 = vmatpush1.bf16.msra.mxu0 %v381
        %404 = vmatprep.subr.bf16.mxu0 0
        %405 = vmatpush1.bf16.msra.mxu0 %v382
        %406 = vmatprep.subr.bf16.mxu0 0
        %407 = vmatpush1.bf16.msra.mxu0 %v383
        %408 = vmatprep.subr.bf16.mxu0 0
        %409 = vmatpush1.bf16.msra.mxu0 0
        %410 = vmatprep.subr.bf16.mxu0 0
        %411 = vmatpush1.bf16.msra.mxu0 0
        %412 = vmatprep.subr.bf16.mxu0 0
        %413 = vmatpush1.bf16.msra.mxu0 0
        %414 = vmatprep.subr.bf16.mxu0 0
        %415 = vmatpush1.bf16.msra.mxu0 0
        %416 = vmatprep.subr.bf16.mxu0 0
        %417 = vmatpush1.bf16.msra.mxu0 0
        %418 = vmatprep.subr.bf16.mxu0 0
        %419 = vmatpush1.bf16.msra.mxu0 0
        %420 = vmatprep.subr.bf16.mxu0 0
        %421 = vmatpush1.bf16.msra.mxu0 0
        %422 = vmatprep.subr.bf16.mxu0 0
        %423 = vmatpush1.bf16.msra.mxu0 0
        %424 = vmatprep.mubr.bf16.mxu0 0
        %425 = vmatmul.mubr.bf16.gmra.mrb[0].mxu0 %v320
        %v426 = vpop.f32.mrb[0].mxu0
        %v427 = vadd.f32 0.0, %v426
        %v428 = vpop.f32.mrb[0].mxu0
        %v429 = vpop.f32.mrb[0].mxu0
        %v430 = vadd.f32 0.0, %v429
        %v431 = vpop.f32.mrb[0].mxu0
        %432 = vmatprep.mubr.bf16.mxu0 0
        %433 = vmatmul.mubr.bf16.gmra.mrb[0].mxu0 %v321
        %v434 = vpop.f32.mrb[0].mxu0
        %v435 = vadd.f32 0.0, %v434
        %v436 = vpop.f32.mrb[0].mxu0
        %v437 = vpop.f32.mrb[0].mxu0
        %v438 = vadd.f32 0.0, %v437
        %v439 = vpop.f32.mrb[0].mxu0
        %440 = vmatprep.mubr.bf16.mxu0 0
        %441 = vmatmul.mubr.bf16.gmra.mrb[0].mxu0 %v322
        %v442 = vpop.f32.mrb[0].mxu0
        %v443 = vadd.f32 0.0, %v442
        %v444 = vpop.f32.mrb[0].mxu0
        %v445 = vpop.f32.mrb[0].mxu0
        %v446 = vadd.f32 0.0, %v445
        %v447 = vpop.f32.mrb[0].mxu0
        %448 = vmatprep.mubr.bf16.mxu0 0
        %449 = vmatmul.mubr.bf16.gmra.mrb[0].mxu0 %v323
        %v450 = vpop.f32.mrb[0].mxu0
        %v451 = vadd.f32 0.0, %v450
        %v452 = vpop.f32.mrb[0].mxu0
        %v453 = vpop.f32.mrb[0].mxu0
        %v454 = vadd.f32 0.0, %v453
        %v455 = vpop.f32.mrb[0].mxu0
        %456 = vmatprep.mubr.bf16.mxu0 0
        %457 = vmatmul.mubr.bf16.gmra.mrb[0].mxu0 %v324
        %v458 = vpop.f32.mrb[0].mxu0
        %v459 = vadd.f32 0.0, %v458
        %v460 = vpop.f32.mrb[0].mxu0
        %v461 = vpop.f32.mrb[0].mxu0
        %v462 = vadd.f32 0.0, %v461
        %v463 = vpop.f32.mrb[0].mxu0
        %464 = vmatprep.mubr.bf16.mxu0 0
        %465 = vmatmul.mubr.bf16.gmra.mrb[0].mxu0 %v325
        %v466 = vpop.f32.mrb[0].mxu0
        %v467 = vadd.f32 0.0, %v466
        %v468 = vpop.f32.mrb[0].mxu0
        %v469 = vpop.f32.mrb[0].mxu0
        %v470 = vadd.f32 0.0, %v469
        %v471 = vpop.f32.mrb[0].mxu0
        %472 = vmatprep.mubr.bf16.mxu0 0
        %473 = vmatmul.mubr.bf16.gmra.mrb[0].mxu0 %v326
        %v474 = vpop.f32.mrb[0].mxu0
        %v475 = vadd.f32 0.0, %v474
        %v476 = vpop.f32.mrb[0].mxu0
        %v477 = vpop.f32.mrb[0].mxu0
        %v478 = vadd.f32 0.0, %v477
        %v479 = vpop.f32.mrb[0].mxu0
        %480 = vmatprep.mubr.bf16.mxu0 0
        %481 = vmatmul.mubr.bf16.gmra.mrb[0].mxu0 %v327
        %v482 = vpop.f32.mrb[0].mxu0
        %v483 = vadd.f32 0.0, %v482
        %v484 = vpop.f32.mrb[0].mxu0
        %v485 = vpop.f32.mrb[0].mxu0
        %v486 = vadd.f32 0.0, %v485
        %v487 = vpop.f32.mrb[0].mxu0
        %488 = vdwg.mxu0
        %v489 = vld [vmem:[#allocation4] sm:$0xf]
        %v490 = vld [vmem:[#allocation4 + $0x4] sm:$0xf]
        %v491 = vld [vmem:[#allocation4 + $0x8] sm:$0xf]
        %v492 = vld [vmem:[#allocation4 + $0xc] sm:$0xf]
        %v493 = vld [vmem:[#allocation4 + $0x10] sm:$0xf]
        %v494 = vld [vmem:[#allocation4 + $0x14] sm:$0xf]
        %v495 = vld [vmem:[#allocation4 + $0x18] sm:$0xf]
        %v496 = vld [vmem:[#allocation4 + $0x1c] sm:$0xf]
        %v497 = vld [vmem:[#allocation4 + $0x20] sm:$0xf]
        %v498 = vld [vmem:[#allocation4 + $0x24] sm:$0xf]
        %v499 = vld [vmem:[#allocation4 + $0x28] sm:$0xf]
        %v500 = vld [vmem:[#allocation4 + $0x2c] sm:$0xf]
        %v501 = vld [vmem:[#allocation4 + $0x30] sm:$0xf]
        %v502 = vld [vmem:[#allocation4 + $0x34] sm:$0xf]
        %v503 = vld [vmem:[#allocation4 + $0x38] sm:$0xf]
        %v504 = vld [vmem:[#allocation4 + $0x3c] sm:$0xf]
        %v505 = vpack.c.bf16 %v430, %v427
        %v506 = vpack.c.bf16 %v438, %v435
        %v507 = vpack.c.bf16 %v446, %v443
        %v508 = vpack.c.bf16 %v454, %v451
        %v509 = vpack.c.bf16 %v462, %v459
        %v510 = vpack.c.bf16 %v470, %v467
        %v511 = vpack.c.bf16 %v478, %v475
        %v512 = vpack.c.bf16 %v486, %v483
        %v513 = vld [vmem:[%s243] sm:$0x1]
        %v515 = vlaneseq
        %v516 = vshrl.u32 %v515, 7
        %v517 = vsub.s32 0, %v516
        %v518 = vrot.slane %v513, %v517
        %v536 = vunpack.c.l.b16 %v489
        %v537 = vunpack.c.l.b16 %v490
        %v538 = vunpack.c.l.b16 %v491
        %v539 = vunpack.c.l.b16 %v492
        %v540 = vunpack.c.l.b16 %v493
        %v541 = vunpack.c.l.b16 %v494
        %v542 = vunpack.c.l.b16 %v495
        %v543 = vunpack.c.l.b16 %v496
        %v544 = vunpack.c.l.b16 %v497
        %v545 = vunpack.c.l.b16 %v498
        %v546 = vunpack.c.l.b16 %v499
        %v547 = vunpack.c.l.b16 %v500
        %v548 = vunpack.c.l.b16 %v501
        %v549 = vunpack.c.l.b16 %v502
        %v550 = vunpack.c.l.b16 %v503
        %v551 = vunpack.c.l.b16 %v504
        %v552 = vpack.c.b16 %v537, %v536
        %v553 = vpack.c.b16 %v539, %v538
        %v554 = vpack.c.b16 %v541, %v540
        %v555 = vpack.c.b16 %v543, %v542
        %v556 = vpack.c.b16 %v545, %v544
        %v557 = vpack.c.b16 %v547, %v546
        %v558 = vpack.c.b16 %v549, %v548
        %v559 = vpack.c.b16 %v551, %v550
        %568 = vmatprep.subr.bf16.mxu0 0
        %569 = vmatpush1.bf16.msra.mxu0 %v505
        %570 = vmatprep.subr.bf16.mxu0 0
        %571 = vmatpush1.bf16.msra.mxu0 %v506
        %572 = vmatprep.subr.bf16.mxu0 0
        %573 = vmatpush1.bf16.msra.mxu0 %v507
        %574 = vmatprep.subr.bf16.mxu0 0
        %575 = vmatpush1.bf16.msra.mxu0 %v508
        %576 = vmatprep.subr.bf16.mxu0 0
        %577 = vmatpush1.bf16.msra.mxu0 %v509
        %578 = vmatprep.subr.bf16.mxu0 0
        %579 = vmatpush1.bf16.msra.mxu0 %v510
        %580 = vmatprep.subr.bf16.mxu0 0
        %581 = vmatpush1.bf16.msra.mxu0 %v511
        %582 = vmatprep.subr.bf16.mxu0 0
        %583 = vmatpush1.bf16.msra.mxu0 %v512
        %584 = vmatprep.subr.bf16.mxu0 0
        %585 = vmatpush1.bf16.msra.mxu0 0
        %586 = vmatprep.subr.bf16.mxu0 0
        %587 = vmatpush1.bf16.msra.mxu0 0
        %588 = vmatprep.subr.bf16.mxu0 0
        %589 = vmatpush1.bf16.msra.mxu0 0
        %590 = vmatprep.subr.bf16.mxu0 0
        %591 = vmatpush1.bf16.msra.mxu0 0
        %592 = vmatprep.subr.bf16.mxu0 0
        %593 = vmatpush1.bf16.msra.mxu0 0
        %594 = vmatprep.subr.bf16.mxu0 0
        %595 = vmatpush1.bf16.msra.mxu0 0
        %596 = vmatprep.subr.bf16.mxu0 0
        %597 = vmatpush1.bf16.msra.mxu0 0
        %598 = vmatprep.subr.bf16.mxu0 0
        %599 = vmatpush1.bf16.msra.mxu0 0
        %600 = vmatprep.mubr.bf16.mxu0 0
        %601 = vmatmul.mubr.bf16.gmra.mrb[0].mxu0 %v552
        %v602 = vpop.f32.mrb[0].mxu0
        %v603 = vadd.f32 %v518, %v602
        %v604 = vpop.f32.mrb[0].mxu0
        %v605 = vpop.f32.mrb[0].mxu0
        %v606 = vadd.f32 %v518, %v605
        %v607 = vpop.f32.mrb[0].mxu0
        %608 = vmatprep.mubr.bf16.mxu0 0
        %609 = vmatmul.mubr.bf16.gmra.mrb[0].mxu0 %v553
        %v610 = vpop.f32.mrb[0].mxu0
        %v611 = vadd.f32 %v518, %v610
        %v612 = vpop.f32.mrb[0].mxu0
        %v613 = vpop.f32.mrb[0].mxu0
        %v614 = vadd.f32 %v518, %v613
        %v615 = vpop.f32.mrb[0].mxu0
        %616 = vmatprep.mubr.bf16.mxu0 0
        %617 = vmatmul.mubr.bf16.gmra.mrb[0].mxu0 %v554
        %v618 = vpop.f32.mrb[0].mxu0
        %v619 = vadd.f32 %v518, %v618
        %v620 = vpop.f32.mrb[0].mxu0
        %v621 = vpop.f32.mrb[0].mxu0
        %v622 = vadd.f32 %v518, %v621
        %v623 = vpop.f32.mrb[0].mxu0
        %624 = vmatprep.mubr.bf16.mxu0 0
        %625 = vmatmul.mubr.bf16.gmra.mrb[0].mxu0 %v555
        %v626 = vpop.f32.mrb[0].mxu0
        %v627 = vadd.f32 %v518, %v626
        %v628 = vpop.f32.mrb[0].mxu0
        %v629 = vpop.f32.mrb[0].mxu0
        %v630 = vadd.f32 %v518, %v629
        %v631 = vpop.f32.mrb[0].mxu0
        %632 = vmatprep.mubr.bf16.mxu0 0
        %633 = vmatmul.mubr.bf16.gmra.mrb[0].mxu0 %v556
        %v634 = vpop.f32.mrb[0].mxu0
        %v635 = vadd.f32 %v518, %v634
        %v636 = vpop.f32.mrb[0].mxu0
        %v637 = vpop.f32.mrb[0].mxu0
        %v638 = vadd.f32 %v518, %v637
        %v639 = vpop.f32.mrb[0].mxu0
        %640 = vmatprep.mubr.bf16.mxu0 0
        %641 = vmatmul.mubr.bf16.gmra.mrb[0].mxu0 %v557
        %v642 = vpop.f32.mrb[0].mxu0
        %v643 = vadd.f32 %v518, %v642
        %v644 = vpop.f32.mrb[0].mxu0
        %v645 = vpop.f32.mrb[0].mxu0
        %v646 = vadd.f32 %v518, %v645
        %v647 = vpop.f32.mrb[0].mxu0
        %648 = vmatprep.mubr.bf16.mxu0 0
        %649 = vmatmul.mubr.bf16.gmra.mrb[0].mxu0 %v558
        %v650 = vpop.f32.mrb[0].mxu0
        %v651 = vadd.f32 %v518, %v650
        %v652 = vpop.f32.mrb[0].mxu0
        %v653 = vpop.f32.mrb[0].mxu0
        %v654 = vadd.f32 %v518, %v653
        %v655 = vpop.f32.mrb[0].mxu0
        %656 = vmatprep.mubr.bf16.mxu0 0
        %657 = vmatmul.mubr.bf16.gmra.mrb[0].mxu0 %v559
        %v658 = vpop.f32.mrb[0].mxu0
        %v659 = vadd.f32 %v518, %v658
        %v660 = vpop.f32.mrb[0].mxu0
        %v661 = vpop.f32.mrb[0].mxu0
        %v662 = vadd.f32 %v518, %v661
        %v663 = vpop.f32.mrb[0].mxu0
        %664 = vdwg.mxu0
        %v665 = vmax.f32 %v603, 0.0
        %v666 = vmax.f32 %v606, 0.0
        %v667 = vmax.f32 %v611, 0.0
        %v668 = vmax.f32 %v614, 0.0
        %v669 = vmax.f32 %v619, 0.0
        %v670 = vmax.f32 %v622, 0.0
        %v671 = vmax.f32 %v627, 0.0
        %v672 = vmax.f32 %v630, 0.0
        %v673 = vmax.f32 %v635, 0.0
        %v674 = vmax.f32 %v638, 0.0
        %v675 = vmax.f32 %v643, 0.0
        %v676 = vmax.f32 %v646, 0.0
        %v677 = vmax.f32 %v651, 0.0
        %v678 = vmax.f32 %v654, 0.0
        %v679 = vmax.f32 %v659, 0.0
        %v680 = vmax.f32 %v662, 0.0
        %s681 = sld [smem:[#allocation3 + %s23]]
        %p682 = scmp.ne.s32.totalorder %s681, 0
        // Predicated region
        $region57: #{tpu_custom_call.1} parent=35 // pred_check
          %p683 = pneg %p682
        $region58: #{tpu_custom_call.1} parent=35 // pred_check_branch
          %685 = sbr.rel (%p683) target = $region60
        $region59: #{tpu_custom_call.1} parent=35 // pred_region
          %v686 = vadd.f32 %v665, %v304
          %v687 = vadd.f32 %v666, %v305
          %v688 = vadd.f32 %v667, %v306
          %v689 = vadd.f32 %v668, %v307
          %v690 = vadd.f32 %v669, %v308
          %v691 = vadd.f32 %v670, %v309
          %v692 = vadd.f32 %v671, %v310
          %v693 = vadd.f32 %v672, %v311
          %v694 = vadd.f32 %v673, %v312
          %v695 = vadd.f32 %v674, %v313
          %v696 = vadd.f32 %v675, %v314
          %v697 = vadd.f32 %v676, %v315
          %v698 = vadd.f32 %v677, %v316
          %v699 = vadd.f32 %v678, %v317
          %v700 = vadd.f32 %v679, %v318
          %v701 = vadd.f32 %v680, %v319
          %702 = vst [vmem:[#allocation11] sm:$0xff] %v686
          %703 = vst [vmem:[#allocation11 + $0x8] sm:$0xff] %v687
          %704 = vst [vmem:[#allocation11 + $0x10] sm:$0xff] %v688
          %705 = vst [vmem:[#allocation11 + $0x18] sm:$0xff] %v689
          %706 = vst [vmem:[#allocation11 + $0x20] sm:$0xff] %v690
          %707 = vst [vmem:[#allocation11 + $0x28] sm:$0xff] %v691
          %708 = vst [vmem:[#allocation11 + $0x30] sm:$0xff] %v692
          %709 = vst [vmem:[#allocation11 + $0x38] sm:$0xff] %v693
          %710 = vst [vmem:[#allocation11 + $0x40] sm:$0xff] %v694
          %711 = vst [vmem:[#allocation11 + $0x48] sm:$0xff] %v695
          %712 = vst [vmem:[#allocation11 + $0x50] sm:$0xff] %v696
          %713 = vst [vmem:[#allocation11 + $0x58] sm:$0xff] %v697
          %714 = vst [vmem:[#allocation11 + $0x60] sm:$0xff] %v698
          %715 = vst [vmem:[#allocation11 + $0x68] sm:$0xff] %v699
          %716 = vst [vmem:[#allocation11 + $0x70] sm:$0xff] %v700
          %717 = vst [vmem:[#allocation11 + $0x78] sm:$0xff] %v701
        $region60: #{tpu_custom_call.1} parent=35 // pred_fallthru
          _
        %s718 = sld [smem:[#allocation3 + %s23]]
        %p719 = scmp.eq.s32.totalorder %s718, 0
        // Predicated region
        $region61: #{tpu_custom_call.1} parent=35 // pred_check
          %p720 = pneg %p719
        $region62: #{tpu_custom_call.1} parent=35 // pred_check_branch
          %722 = sbr.rel (%p720) target = $region64
        $region63: #{tpu_custom_call.1} parent=35 // pred_region
          %723 = vst [vmem:[#allocation11] sm:$0xff] %v665
          %724 = vst [vmem:[#allocation11 + $0x8] sm:$0xff] %v666
          %725 = vst [vmem:[#allocation11 + $0x10] sm:$0xff] %v667
          %726 = vst [vmem:[#allocation11 + $0x18] sm:$0xff] %v668
          %727 = vst [vmem:[#allocation11 + $0x20] sm:$0xff] %v669
          %728 = vst [vmem:[#allocation11 + $0x28] sm:$0xff] %v670
          %729 = vst [vmem:[#allocation11 + $0x30] sm:$0xff] %v671
          %730 = vst [vmem:[#allocation11 + $0x38] sm:$0xff] %v672
          %731 = vst [vmem:[#allocation11 + $0x40] sm:$0xff] %v673
          %732 = vst [vmem:[#allocation11 + $0x48] sm:$0xff] %v674
          %733 = vst [vmem:[#allocation11 + $0x50] sm:$0xff] %v675
          %734 = vst [vmem:[#allocation11 + $0x58] sm:$0xff] %v676
          %735 = vst [vmem:[#allocation11 + $0x60] sm:$0xff] %v677
          %736 = vst [vmem:[#allocation11 + $0x68] sm:$0xff] %v678
          %737 = vst [vmem:[#allocation11 + $0x70] sm:$0xff] %v679
          %738 = vst [vmem:[#allocation11 + $0x78] sm:$0xff] %v680
        $region64: #{tpu_custom_call.1} parent=35 // pred_fallthru
          _
        // Predicated region
        $region65: #{tpu_custom_call.1} parent=35 // pred_check
          %p739 = pneg %p130
        $region66: #{tpu_custom_call.1} parent=35 // pred_check_branch
          %741 = sbr.rel (%p739) target = $region68
        $region67: #{tpu_custom_call.1} parent=35 // pred_region
          %s743 = ssub.s32 2048, 2048
          %744 = vsyncadd [#allocation6], %s743
          %s745 = sshll.u32 [#allocation11], 4
          %s746 = int_to_ptr.vmem [resolvable:$true] %s745
          %751 = dma.vmem_to_hbm [thread:$0]  %s746, 2048, %s5, [#allocation6], 128, 128, 8
        $region68: #{tpu_custom_call.1} parent=35 // pred_fallthru
          _
        // Predicated region
        $region69: #{tpu_custom_call.1} parent=35 // pred_check
          %p752 = pneg %p130
        $region70: #{tpu_custom_call.1} parent=35 // pred_check_branch
          %754 = sbr.rel (%p752) target = $region72
        $region71: #{tpu_custom_call.1} parent=35 // pred_region
          %755 = dma.done [#allocation6], 2048
        $region72: #{tpu_custom_call.1} parent=35 // pred_fallthru
          _
      $region36: #{tpu_custom_call.1} parent=5 // pred_fallthru
        _
      %p756 = scmp.le.s32.totalorder 2, %s18
      // Predicated region
      $region73: #{tpu_custom_call.1} parent=5 // pred_check
        %p757 = pneg %p756
      $region74: #{tpu_custom_call.1} parent=5 // pred_check_branch
        %759 = sbr.rel (%p757) target = $region76
      $region75: #{tpu_custom_call.1} parent=5 // pred_region
        %s760 = ssub.s32 %s18, 2
      $region76: #{tpu_custom_call.1} parent=5 // pred_fallthru
        _
    $region6: #{tpu_custom_call.1} parent=1 // loop_footer
      %s22 = sadd.s32 1, %s18
    $region7: #{tpu_custom_call.1} parent=1 // loop_footer_branch
      %17 = sbr.rel target = $region3
    $region8: #{tpu_custom_call.1} parent=1 // loop_exit
      _
    %761 = vsyncpa [#allocation5], 1
    %s762 = scalar_lea.sflag [#allocation5], 1
    %763 = vsyncpa %s762, 1
    %764 = vsyncpa [#allocation8], 1
    %765 = vsyncpa [#allocation6], 1
    %s766 = scalar_lea.sflag [#allocation6], 1
    %767 = vsyncpa %s766, 1

// kernel: tpu_custom_call.1
$region0: #{tpu_custom_call.1}
  #allocation0 [shape = 'u32[]', space=smem, size = 0x4, offset = 0x4, fixed_abs, tag = 'smem constant byte address 0x4 - core index']
  #allocation1 [shape = 'u32[144,128]{1,0:T(1,128)}', space=vmem, size = 0x12000, scoped, tag = 'internal scratch']
  #allocation2 [shape = 's32[1]{0}', space=sflag, size = 0x4, scoped, tag = 'scoped memory for tpu_custom_call.1']
  #allocation3 [shape = 'u8[512]{0}', space=smem, size = 0x200, scoped, tag = 'prefetched SMEM operand 0']
  %s0 = inlined_call_operand.hbm [shape: s32[2], index: 0, kind: input, shape index: {}]
  %s1 = inlined_call_operand.hbm [shape: bf16[128,128], index: 1, kind: input, shape index: {}]
  %s2 = inlined_call_operand.hbm [shape: f32[128,128], index: 2, kind: input, shape index: {}]
  %s3 = inlined_call_operand.hbm [shape: bf16[2,128,128], index: 3, kind: input, shape index: {}]
  %s4 = inlined_call_operand.hbm [shape: f32[2,1,128], index: 4, kind: input, shape index: {}]
  %s5 = inlined_call_operand.hbm [shape: f32[128,128], index: 5, kind: output, shape index: {}]
  %s6 = sld [smem:[#allocation0]]
  $region77: #{tpu_custom_call.1} parent=0
    _
  %s8 = ssub.s32 1, %s6
  %s9 = scalar_select 0, %s8, %s6
  %11 = dma.hbm_to_smem %s0, 16, [#allocation3], [#allocation2]
  %12 = dma.done [#allocation2], 16
  %13 = sfence
  $region1: #{tpu_custom_call.1} parent=0
    #allocation4 [shape = 'u8[32768]{0}', space=vmem, size = 0x8000, scoped, tag = 'input window, operand 1, single buffered']
    #allocation5 [shape = 's32[2]{0}', space=sflag, size = 0x8, scoped, tag = 'scoped memory for tpu_custom_call.1']
    #allocation6 [shape = 's32[2]{0}', space=sflag, size = 0x8, scoped, tag = 'scoped memory for tpu_custom_call.1']
    #allocation7 [shape = 'u8[65536]{0}', space=vmem, size = 0x10000, scoped, tag = 'input window, operand 2, single buffered']
    #allocation8 [shape = 's32[1]{0}', space=sflag, size = 0x4, scoped, tag = 'scoped memory for tpu_custom_call.1']
    #allocation9 [shape = 'u8[65536]{0}', space=vmem, size = 0x10000, scoped, tag = 'input window, operand 3']
    #allocation10 [shape = 'u8[1024]{0}', space=vmem, size = 0x400, scoped, tag = 'input window, operand 4']
    #allocation11 [shape = 'u8[65536]{0}', space=vmem, size = 0x10000, scoped, tag = 'output window, operand 0, single buffered']
    %14 = vsyncpa [#allocation5], 0
    %15 = vsyncpa [#allocation8], 0
    %16 = vsyncpa [#allocation6], 0
    loop: start=0, step=1, limit=4
    $region2: #{tpu_custom_call.1} parent=1 // loop_pre_header
      _
    $region3: #{tpu_custom_call.1} parent=1 // loop_header
      %s18 = sphi 0, %s22
      %p19 = scmp.ge.s32.totalorder %s18, 4
      %s26 = sphi 0, %s26
      %s28 = sphi 0, %s26
      %s29 = sphi 0, %s28
      %s43 = sphi 0, %s29
      %s47 = sphi 0, %s47
      %s49 = sphi 0, %s47
      %s50 = sphi 0, %s49
      %s64 = sphi 0, %s50
      %s70 = sphi 0, %s72
      %s73 = sphi 0, %s70
      %s74 = sphi 0, %s73
      %s90 = sphi 0, %s74
      %s96 = sphi 0, %s98
      %s99 = sphi 0, %s96
      %s100 = sphi 0, %s99
      %s116 = sphi 0, %s100
      %s120 = sphi 0, %s120
      %s122 = sphi 0, %s120
      %s123 = sphi 0, %s122
      %s137 = sphi 0, %s123
    $region4: #{tpu_custom_call.1} parent=1 // loop_header_branch
      %21 = sbr.rel (%p19) target = $region8
    $region5: #{tpu_custom_call.1} parent=1 // loop_body
      %s23 = ssub.s32 %s18, 1
      %s24 = ssub.s32 %s18, 2
      %s25 = sadd.s32 %s18, 1
      %s27 = sadd.s32 %s26, 1
      %p30 = scmp.eq.s32.totalorder %s18, 1
      %p31 = scmp.ne.s32.totalorder %s26, %s28
      %p32 = scmp.eq.s32.totalorder %s18, 0
      %p33 = por %p31, %p32
      %p34 = scmp.ne.s32.totalorder %s26, %s28
      %p35 = scmp.eq.s32.totalorder %s23, 1
      %p36 = por %p34, %p35
      %p37 = scmp.ne.s32.totalorder %s28, %s29
      %p38 = scmp.eq.s32.totalorder %s23, 0
      %p39 = por %p37, %p38
      %p40 = scmp.ne.s32.totalorder %s28, %s29
      %p41 = scmp.eq.s32.totalorder %s24, 1
      %p42 = por %p40, %p41
      %p44 = scmp.ne.s32.totalorder %s29, %s43
      %p45 = scmp.eq.s32.totalorder %s24, 0
      %p46 = por %p44, %p45
      %s48 = sadd.s32 %s47, 1
      %p51 = scmp.eq.s32.totalorder %s18, 1
      %p52 = scmp.ne.s32.totalorder %s47, %s49
      %p53 = scmp.eq.s32.totalorder %s18, 0
      %p54 = por %p52, %p53
      %p55 = scmp.ne.s32.totalorder %s47, %s49
      %p56 = scmp.eq.s32.totalorder %s23, 1
      %p57 = por %p55, %p56
      %p58 = scmp.ne.s32.totalorder %s49, %s50
      %p59 = scmp.eq.s32.totalorder %s23, 0
      %p60 = por %p58, %p59
      %p61 = scmp.ne.s32.totalorder %s49, %s50
      %p62 = scmp.eq.s32.totalorder %s24, 1
      %p63 = por %p61, %p62
      %p65 = scmp.ne.s32.totalorder %s50, %s64
      %p66 = scmp.eq.s32.totalorder %s24, 0
      %p67 = por %p65, %p66
      %s68 = ssub.s32 %s18, %s25
      %p69 = scmp.eq.s32.totalorder %s68, 0
      %s71 = sadd.s32 %s70, 1
      %s72 = scalar_select %p69, %s70, %s71
      %p75 = pneg %p69
      %p76 = scmp.eq.s32.totalorder %s18, 1
      %p77 = por %p75, %p76
      %p78 = scmp.ne.s32.totalorder %s70, %s73
      %p79 = scmp.eq.s32.totalorder %s18, 0
      %p80 = por %p78, %p79
      %p81 = scmp.ne.s32.totalorder %s70, %s73
      %p82 = scmp.eq.s32.totalorder %s23, 1
      %p83 = por %p81, %p82
      %p84 = scmp.ne.s32.totalorder %s73, %s74
      %p85 = scmp.eq.s32.totalorder %s23, 0
      %p86 = por %p84, %p85
      %p87 = scmp.ne.s32.totalorder %s73, %s74
      %p88 = scmp.eq.s32.totalorder %s24, 1
      %p89 = por %p87, %p88
      %p91 = scmp.ne.s32.totalorder %s74, %s90
      %p92 = scmp.eq.s32.totalorder %s24, 0
      %p93 = por %p91, %p92
      %s94 = ssub.s32 %s18, %s25
      %p95 = scmp.eq.s32.totalorder %s94, 0
      %s97 = sadd.s32 %s96, 1
      %s98 = scalar_select %p95, %s96, %s97
      %p101 = pneg %p95
      %p102 = scmp.eq.s32.totalorder %s18, 1
      %p103 = por %p101, %p102
      %p104 = scmp.ne.s32.totalorder %s96, %s99
      %p105 = scmp.eq.s32.totalorder %s18, 0
      %p106 = por %p104, %p105
      %p107 = scmp.ne.s32.totalorder %s96, %s99
      %p108 = scmp.eq.s32.totalorder %s23, 1
      %p109 = por %p107, %p108
      %p110 = scmp.ne.s32.totalorder %s99, %s100
      %p111 = scmp.eq.s32.totalorder %s23, 0
      %p112 = por %p110, %p111
      %p113 = scmp.ne.s32.totalorder %s99, %s100
      %p114 = scmp.eq.s32.totalorder %s24, 1
      %p115 = por %p113, %p114
      %p117 = scmp.ne.s32.totalorder %s100, %s116
      %p118 = scmp.eq.s32.totalorder %s24, 0
      %p119 = por %p117, %p118
      %s121 = sadd.s32 %s120, 1
      %p124 = scmp.eq.s32.totalorder %s18, 1
      %p125 = scmp.ne.s32.totalorder %s120, %s122
      %p126 = scmp.eq.s32.totalorder %s18, 0
      %p127 = por %p125, %p126
      %p128 = scmp.ne.s32.totalorder %s120, %s122
      %p129 = scmp.eq.s32.totalorder %s23, 1
      %p130 = por %p128, %p129
      %p131 = scmp.ne.s32.totalorder %s122, %s123
      %p132 = scmp.eq.s32.totalorder %s23, 0
      %p133 = por %p131, %p132
      %p134 = scmp.ne.s32.totalorder %s122, %s123
      %p135 = scmp.eq.s32.totalorder %s24, 1
      %p136 = por %p134, %p135
      %p138 = scmp.ne.s32.totalorder %s123, %s137
      %p139 = scmp.eq.s32.totalorder %s24, 0
      %p140 = por %p138, %p139
      %p141 = scmp.le.s32.totalorder 1, %s18
      %p142 = scmp.lt.s32.totalorder %s18, 3
      %p143 = pnand %p141, %p142
      %p144 = pneg %p143
      // Predicated region
      $region9: #{tpu_custom_call.1} parent=5 // pred_check
        _
      $region10: #{tpu_custom_call.1} parent=5 // pred_check_branch
        %146 = sbr.rel (%p143) target = $region12
      $region11: #{tpu_custom_call.1} parent=5 // pred_region
        %s147 = ssub.s32 %s18, 1
        // Predicated region
        $region13: #{tpu_custom_call.1} parent=11 // pred_check
          %p148 = pneg %p39
        $region14: #{tpu_custom_call.1} parent=11 // pred_check_branch
          %150 = sbr.rel (%p148) target = $region16
        $region15: #{tpu_custom_call.1} parent=11 // pred_region
          %s152 = ssub.s32 1024, 1024
          %153 = vsyncadd [#allocation5], %s152
          %s154 = sshll.u32 [#allocation4], 4
          %s155 = int_to_ptr.vmem [resolvable:$true] %s154
          %160 = dma.hbm_to_vmem [thread:$0]  %s1, 1024, %s155, [#allocation5], 64, 64, 4
        $region16: #{tpu_custom_call.1} parent=11 // pred_fallthru
          _
        // Predicated region
        $region17: #{tpu_custom_call.1} parent=11 // pred_check
          %p161 = pneg %p60
        $region18: #{tpu_custom_call.1} parent=11 // pred_check_branch
          %163 = sbr.rel (%p161) target = $region20
        $region19: #{tpu_custom_call.1} parent=11 // pred_region
          %s165 = ssub.s32 2048, 2048
          %166 = vsyncadd [#allocation8], %s165
          %s167 = sshll.u32 [#allocation7], 4
          %s168 = int_to_ptr.vmem [resolvable:$true] %s167
          %173 = dma.hbm_to_vmem [thread:$0]  %s2, 2048, %s168, [#allocation8], 128, 128, 8
        $region20: #{tpu_custom_call.1} parent=11 // pred_fallthru
          _
      $region12: #{tpu_custom_call.1} parent=5 // pred_fallthru
        _
      %p174 = scmp.lt.s32.totalorder %s18, 2
      // Predicated region
      $region21: #{tpu_custom_call.1} parent=5 // pred_check
        %p175 = pneg %p174
      $region22: #{tpu_custom_call.1} parent=5 // pred_check_branch
        %177 = sbr.rel (%p175) target = $region24
      $region23: #{tpu_custom_call.1} parent=5 // pred_region
        // Predicated region
        $region25: #{tpu_custom_call.1} parent=23 // pred_check
          %p178 = pneg %p80
        $region26: #{tpu_custom_call.1} parent=23 // pred_check_branch
          %180 = sbr.rel (%p178) target = $region28
        $region27: #{tpu_custom_call.1} parent=23 // pred_region
          %s181 = sand.u32 %s18, 1
          %s182 = scalar_lea.sflag [#allocation5], %s181
          %s183 = sand.u32 %s70, 1
          %s184 = smul.addr %s183, 64
          %s185 = scalar_lea.vmem [#allocation9], %s184
          %s187 = ssub.s32 1024, 1024
          %188 = vsyncadd %s182, %s187
          %s189 = smul.addr %s18, 16
          %s190 = smul.addr %s189, 64
          %s191 = scalar_lea.hbm %s3, %s190
          %s192 = sshll.u32 %s185, 4
          %s193 = int_to_ptr.vmem [resolvable:$true] %s192
          %198 = dma.hbm_to_vmem [thread:$0]  %s191, 1024, %s193, %s182, 64, 64, 4
        $region28: #{tpu_custom_call.1} parent=23 // pred_fallthru
          _
        // Predicated region
        $region29: #{tpu_custom_call.1} parent=23 // pred_check
          %p199 = pneg %p106
        $region30: #{tpu_custom_call.1} parent=23 // pred_check_branch
          %201 = sbr.rel (%p199) target = $region32
        $region31: #{tpu_custom_call.1} parent=23 // pred_region
          %s202 = sand.u32 %s18, 1
          %s203 = scalar_lea.sflag [#allocation5], %s202
          %s204 = sand.u32 %s96, 1
          %s205 = scalar_lea.vmem [#allocation10], %s204
          %s207 = ssub.s32 16, 16
          %208 = vsyncadd %s203, %s207
          %s209 = smul.addr %s18, 16
          %s210 = scalar_lea.hbm %s4, %s209
          %s212 = sshll.u32 %s205, 4
          %s213 = int_to_ptr.vmem [resolvable:$true] %s212
          %215 = dma.hbm_to_vmem [thread:$0]  %s210, 16, %s213, %s203
        $region32: #{tpu_custom_call.1} parent=23 // pred_fallthru
          _
      $region24: #{tpu_custom_call.1} parent=5 // pred_fallthru
        _
      %p216 = scmp.le.s32.totalorder 1, %s18
      %p217 = scmp.lt.s32.totalorder %s18, 3
      %p218 = pnand %p216, %p217
      %p219 = pneg %p218
      // Predicated region
      $region33: #{tpu_custom_call.1} parent=5 // pred_check
        _
      $region34: #{tpu_custom_call.1} parent=5 // pred_check_branch
        %221 = sbr.rel (%p218) target = $region36
      $region35: #{tpu_custom_call.1} parent=5 // pred_region
        %s222 = ssub.s32 %s18, 1
        // Predicated region
        $region37: #{tpu_custom_call.1} parent=35 // pred_check
          %p223 = pneg %p39
        $region38: #{tpu_custom_call.1} parent=35 // pred_check_branch
          %225 = sbr.rel (%p223) target = $region40
        $region39: #{tpu_custom_call.1} parent=35 // pred_region
          %226 = dma.done [#allocation5], 1024
        $region40: #{tpu_custom_call.1} parent=35 // pred_fallthru
          _
        // Predicated region
        $region41: #{tpu_custom_call.1} parent=35 // pred_check
          %p227 = pneg %p60
        $region42: #{tpu_custom_call.1} parent=35 // pred_check_branch
          %229 = sbr.rel (%p227) target = $region44
        $region43: #{tpu_custom_call.1} parent=35 // pred_region
          %230 = dma.done [#allocation8], 2048
        $region44: #{tpu_custom_call.1} parent=35 // pred_fallthru
          _
        %s231 = sand.u32 %s23, 1
        %s232 = scalar_lea.sflag [#allocation5], %s231
        %s233 = sand.u32 %s73, 1
        %s234 = smul.addr %s233, 64
        %s235 = scalar_lea.vmem [#allocation9], %s234
        // Predicated region
        $region45: #{tpu_custom_call.1} parent=35 // pred_check
          %p236 = pneg %p86
        $region46: #{tpu_custom_call.1} parent=35 // pred_check_branch
          %238 = sbr.rel (%p236) target = $region48
        $region47: #{tpu_custom_call.1} parent=35 // pred_region
          %239 = dma.done %s232, 1024
        $region48: #{tpu_custom_call.1} parent=35 // pred_fallthru
          _
        %s240 = sand.u32 %s23, 1
        %s241 = scalar_lea.sflag [#allocation5], %s240
        %s242 = sand.u32 %s99, 1
        %s243 = scalar_lea.vmem [#allocation10], %s242
        // Predicated region
        $region49: #{tpu_custom_call.1} parent=35 // pred_check
          %p244 = pneg %p112
        $region50: #{tpu_custom_call.1} parent=35 // pred_check_branch
          %246 = sbr.rel (%p244) target = $region52
        $region51: #{tpu_custom_call.1} parent=35 // pred_region
          %247 = dma.done %s241, 16
        $region52: #{tpu_custom_call.1} parent=35 // pred_fallthru
          _
        %p248 = pneg %p39
        %p249 = pneg %p36
        %p250 = pneg %p60
        %p251 = pneg %p57
        %s252 = sand.u32 %s23, 1
        %s253 = scalar_lea.sflag [#allocation5], %s252
        %s254 = sand.u32 %s73, 1
        %s255 = smul.addr %s254, 64
        %s256 = scalar_lea.vmem [#allocation9], %s255
        %p257 = pneg %p86
        %p258 = pneg %p83
        %s259 = sand.u32 %s23, 1
        %s260 = scalar_lea.sflag [#allocation5], %s259
        %s261 = sand.u32 %s99, 1
        %s262 = scalar_lea.vmem [#allocation10], %s261
        %p263 = pneg %p112
        %p264 = pneg %p109
        %p265 = pneg %p133
        %p266 = pneg %p130
        %p268 = scmp.eq.s32.totalorder %s23, 0
        // Predicated region
        $region53: #{tpu_custom_call.1} parent=35 // pred_check
          %p269 = pneg %p268
        $region54: #{tpu_custom_call.1} parent=35 // pred_check_branch
          %271 = sbr.rel (%p269) target = $region56
        $region55: #{tpu_custom_call.1} parent=35 // pred_region
          %v272 = vld [vmem:[#allocation7] sm:$0xff]
          %v273 = vld [vmem:[#allocation7 + $0x8] sm:$0xff]
          %v274 = vld [vmem:[#allocation7 + $0x10] sm:$0xff]
          %v275 = vld [vmem:[#allocation7 + $0x18] sm:$0xff]
          %v276 = vld [vmem:[#allocation7 + $0x20] sm:$0xff]
          %v277 = vld [vmem:[#allocation7 + $0x28] sm:$0xff]
          %v278 = vld [vmem:[#allocation7 + $0x30] sm:$0xff]
          %v279 = vld [vmem:[#allocation7 + $0x38] sm:$0xff]
          %v280 = vld [vmem:[#allocation7 + $0x40] sm:$0xff]
          %v281 = vld [vmem:[#allocation7 + $0x48] sm:$0xff]
          %v282 = vld [vmem:[#allocation7 + $0x50] sm:$0xff]
          %v283 = vld [vmem:[#allocation7 + $0x58] sm:$0xff]
          %v284 = vld [vmem:[#allocation7 + $0x60] sm:$0xff]
          %v285 = vld [vmem:[#allocation7 + $0x68] sm:$0xff]
          %v286 = vld [vmem:[#allocation7 + $0x70] sm:$0xff]
          %v287 = vld [vmem:[#allocation7 + $0x78] sm:$0xff]
          %288 = vst [vmem:[#allocation11] sm:$0xff] %v272
          %289 = vst [vmem:[#allocation11 + $0x8] sm:$0xff] %v273
          %290 = vst [vmem:[#allocation11 + $0x10] sm:$0xff] %v274
          %291 = vst [vmem:[#allocation11 + $0x18] sm:$0xff] %v275
          %292 = vst [vmem:[#allocation11 + $0x20] sm:$0xff] %v276
          %293 = vst [vmem:[#allocation11 + $0x28] sm:$0xff] %v277
          %294 = vst [vmem:[#allocation11 + $0x30] sm:$0xff] %v278
          %295 = vst [vmem:[#allocation11 + $0x38] sm:$0xff] %v279
          %296 = vst [vmem:[#allocation11 + $0x40] sm:$0xff] %v280
          %297 = vst [vmem:[#allocation11 + $0x48] sm:$0xff] %v281
          %298 = vst [vmem:[#allocation11 + $0x50] sm:$0xff] %v282
          %299 = vst [vmem:[#allocation11 + $0x58] sm:$0xff] %v283
          %300 = vst [vmem:[#allocation11 + $0x60] sm:$0xff] %v284
          %301 = vst [vmem:[#allocation11 + $0x68] sm:$0xff] %v285
          %302 = vst [vmem:[#allocation11 + $0x70] sm:$0xff] %v286
          %303 = vst [vmem:[#allocation11 + $0x78] sm:$0xff] %v287
        $region56: #{tpu_custom_call.1} parent=35 // pred_fallthru
          _
        %v304 = vld [vmem:[#allocation11] sm:$0xff]
        %v305 = vld [vmem:[#allocation11 + $0x8] sm:$0xff]
        %v306 = vld [vmem:[#allocation11 + $0x10] sm:$0xff]
        %v307 = vld [vmem:[#allocation11 + $0x18] sm:$0xff]
        %v308 = vld [vmem:[#allocation11 + $0x20] sm:$0xff]
        %v309 = vld [vmem:[#allocation11 + $0x28] sm:$0xff]
        %v310 = vld [vmem:[#allocation11 + $0x30] sm:$0xff]
        %v311 = vld [vmem:[#allocation11 + $0x38] sm:$0xff]
        %v312 = vld [vmem:[#allocation11 + $0x40] sm:$0xff]
        %v313 = vld [vmem:[#allocation11 + $0x48] sm:$0xff]
        %v314 = vld [vmem:[#allocation11 + $0x50] sm:$0xff]
        %v315 = vld [vmem:[#allocation11 + $0x58] sm:$0xff]
        %v316 = vld [vmem:[#allocation11 + $0x60] sm:$0xff]
        %v317 = vld [vmem:[#allocation11 + $0x68] sm:$0xff]
        %v318 = vld [vmem:[#allocation11 + $0x70] sm:$0xff]
        %v319 = vld [vmem:[#allocation11 + $0x78] sm:$0xff]
        %v320 = vpack.c.bf16 %v305, %v304
        %v321 = vpack.c.bf16 %v307, %v306
        %v322 = vpack.c.bf16 %v309, %v308
        %v323 = vpack.c.bf16 %v311, %v310
        %v324 = vpack.c.bf16 %v313, %v312
        %v325 = vpack.c.bf16 %v315, %v314
        %v326 = vpack.c.bf16 %v317, %v316
        %v327 = vpack.c.bf16 %v319, %v318
        %v328 = vld [vmem:[%s235] sm:$0xf]
        %v329 = vld [vmem:[%s235 + $0x4] sm:$0xf]
        %v330 = vld [vmem:[%s235 + $0x8] sm:$0xf]
        %v331 = vld [vmem:[%s235 + $0xc] sm:$0xf]
        %v332 = vld [vmem:[%s235 + $0x10] sm:$0xf]
        %v333 = vld [vmem:[%s235 + $0x14] sm:$0xf]
        %v334 = vld [vmem:[%s235 + $0x18] sm:$0xf]
        %v335 = vld [vmem:[%s235 + $0x1c] sm:$0xf]
        %v336 = vld [vmem:[%s235 + $0x20] sm:$0xf]
        %v337 = vld [vmem:[%s235 + $0x24] sm:$0xf]
        %v338 = vld [vmem:[%s235 + $0x28] sm:$0xf]
        %v339 = vld [vmem:[%s235 + $0x2c] sm:$0xf]
        %v340 = vld [vmem:[%s235 + $0x30] sm:$0xf]
        %v341 = vld [vmem:[%s235 + $0x34] sm:$0xf]
        %v342 = vld [vmem:[%s235 + $0x38] sm:$0xf]
        %v343 = vld [vmem:[%s235 + $0x3c] sm:$0xf]
        %v360 = vunpack.c.l.b16 %v328
        %v361 = vunpack.c.l.b16 %v329
        %v362 = vunpack.c.l.b16 %v330
        %v363 = vunpack.c.l.b16 %v331
        %v364 = vunpack.c.l.b16 %v332
        %v365 = vunpack.c.l.b16 %v333
        %v366 = vunpack.c.l.b16 %v334
        %v367 = vunpack.c.l.b16 %v335
        %v368 = vunpack.c.l.b16 %v336
        %v369 = vunpack.c.l.b16 %v337
        %v370 = vunpack.c.l.b16 %v338
        %v371 = vunpack.c.l.b16 %v339
        %v372 = vunpack.c.l.b16 %v340
        %v373 = vunpack.c.l.b16 %v341
        %v374 = vunpack.c.l.b16 %v342
        %v375 = vunpack.c.l.b16 %v343
        %v376 = vpack.c.b16 %v361, %v360
        %v377 = vpack.c.b16 %v363, %v362
        %v378 = vpack.c.b16 %v365, %v364
        %v379 = vpack.c.b16 %v367, %v366
        %v380 = vpack.c.b16 %v369, %v368
        %v381 = vpack.c.b16 %v371, %v370
        %v382 = vpack.c.b16 %v373, %v372
        %v383 = vpack.c.b16 %v375, %v374
        %392 = vmatprep.subr.bf16.mxu0 0
        %393 = vmatpush1.bf16.msra.mxu0 %v376
        %394 = vmatprep.subr.bf16.mxu0 0
        %395 = vmatpush1.bf16.msra.mxu0 %v377
        %396 = vmatprep.subr.bf16.mxu0 0
        %397 = vmatpush1.bf16.msra.mxu0 %v378
        %398 = vmatprep.subr.bf16.mxu0 0
        %399 = vmatpush1.bf16.msra.mxu0 %v379
        %400 = vmatprep.subr.bf16.mxu0 0
        %401 = vmatpush1.bf16.msra.mxu0 %v380
        %402 = vmatprep.subr.bf16.mxu0 0
        %403 = vmatpush1.bf16.msra.mxu0 %v381
        %404 = vmatprep.subr.bf16.mxu0 0
        %405 = vmatpush1.bf16.msra.mxu0 %v382
        %406 = vmatprep.subr.bf16.mxu0 0
        %407 = vmatpush1.bf16.msra.mxu0 %v383
        %408 = vmatprep.subr.bf16.mxu0 0
        %409 = vmatpush1.bf16.msra.mxu0 0
        %410 = vmatprep.subr.bf16.mxu0 0
        %411 = vmatpush1.bf16.msra.mxu0 0
        %412 = vmatprep.subr.bf16.mxu0 0
        %413 = vmatpush1.bf16.msra.mxu0 0
        %414 = vmatprep.subr.bf16.mxu0 0
        %415 = vmatpush1.bf16.msra.mxu0 0
        %416 = vmatprep.subr.bf16.mxu0 0
        %417 = vmatpush1.bf16.msra.mxu0 0
        %418 = vmatprep.subr.bf16.mxu0 0
        %419 = vmatpush1.bf16.msra.mxu0 0
        %420 = vmatprep.subr.bf16.mxu0 0
        %421 = vmatpush1.bf16.msra.mxu0 0
        %422 = vmatprep.subr.bf16.mxu0 0
        %423 = vmatpush1.bf16.msra.mxu0 0
        %424 = vmatprep.mubr.bf16.mxu0 0
        %425 = vmatmul.mubr.bf16.gmra.mrb[0].mxu0 %v320
        %v426 = vpop.f32.mrb[0].mxu0
        %v427 = vadd.f32 0.0, %v426
        %v428 = vpop.f32.mrb[0].mxu0
        %v429 = vpop.f32.mrb[0].mxu0
        %v430 = vadd.f32 0.0, %v429
        %v431 = vpop.f32.mrb[0].mxu0
        %432 = vmatprep.mubr.bf16.mxu0 0
        %433 = vmatmul.mubr.bf16.gmra.mrb[0].mxu0 %v321
        %v434 = vpop.f32.mrb[0].mxu0
        %v435 = vadd.f32 0.0, %v434
        %v436 = vpop.f32.mrb[0].mxu0
        %v437 = vpop.f32.mrb[0].mxu0
        %v438 = vadd.f32 0.0, %v437
        %v439 = vpop.f32.mrb[0].mxu0
        %440 = vmatprep.mubr.bf16.mxu0 0
        %441 = vmatmul.mubr.bf16.gmra.mrb[0].mxu0 %v322
        %v442 = vpop.f32.mrb[0].mxu0
        %v443 = vadd.f32 0.0, %v442
        %v444 = vpop.f32.mrb[0].mxu0
        %v445 = vpop.f32.mrb[0].mxu0
        %v446 = vadd.f32 0.0, %v445
        %v447 = vpop.f32.mrb[0].mxu0
        %448 = vmatprep.mubr.bf16.mxu0 0
        %449 = vmatmul.mubr.bf16.gmra.mrb[0].mxu0 %v323
        %v450 = vpop.f32.mrb[0].mxu0
        %v451 = vadd.f32 0.0, %v450
        %v452 = vpop.f32.mrb[0].mxu0
        %v453 = vpop.f32.mrb[0].mxu0
        %v454 = vadd.f32 0.0, %v453
        %v455 = vpop.f32.mrb[0].mxu0
        %456 = vmatprep.mubr.bf16.mxu0 0
        %457 = vmatmul.mubr.bf16.gmra.mrb[0].mxu0 %v324
        %v458 = vpop.f32.mrb[0].mxu0
        %v459 = vadd.f32 0.0, %v458
        %v460 = vpop.f32.mrb[0].mxu0
        %v461 = vpop.f32.mrb[0].mxu0
        %v462 = vadd.f32 0.0, %v461
        %v463 = vpop.f32.mrb[0].mxu0
        %464 = vmatprep.mubr.bf16.mxu0 0
        %465 = vmatmul.mubr.bf16.gmra.mrb[0].mxu0 %v325
        %v466 = vpop.f32.mrb[0].mxu0
        %v467 = vadd.f32 0.0, %v466
        %v468 = vpop.f32.mrb[0].mxu0
        %v469 = vpop.f32.mrb[0].mxu0
        %v470 = vadd.f32 0.0, %v469
        %v471 = vpop.f32.mrb[0].mxu0
        %472 = vmatprep.mubr.bf16.mxu0 0
        %473 = vmatmul.mubr.bf16.gmra.mrb[0].mxu0 %v326
        %v474 = vpop.f32.mrb[0].mxu0
        %v475 = vadd.f32 0.0, %v474
        %v476 = vpop.f32.mrb[0].mxu0
        %v477 = vpop.f32.mrb[0].mxu0
        %v478 = vadd.f32 0.0, %v477
        %v479 = vpop.f32.mrb[0].mxu0
        %480 = vmatprep.mubr.bf16.mxu0 0
        %481 = vmatmul.mubr.bf16.gmra.mrb[0].mxu0 %v327
        %v482 = vpop.f32.mrb[0].mxu0
        %v483 = vadd.f32 0.0, %v482
        %v484 = vpop.f32.mrb[0].mxu0
        %v485 = vpop.f32.mrb[0].mxu0
        %v486 = vadd.f32 0.0, %v485
        %v487 = vpop.f32.mrb[0].mxu0
        %488 = vdwg.mxu0
        %v489 = vld [vmem:[#allocation4] sm:$0xf]
        %v490 = vld [vmem:[#allocation4 + $0x4] sm:$0xf]
        %v491 = vld [vmem:[#allocation4 + $0x8] sm:$0xf]
        %v492 = vld [vmem:[#allocation4 + $0xc] sm:$0xf]
        %v493 = vld [vmem:[#allocation4 + $0x10] sm:$0xf]
        %v494 = vld [vmem:[#allocation4 + $0x14] sm:$0xf]
        %v495 = vld [vmem:[#allocation4 + $0x18] sm:$0xf]
        %v496 = vld [vmem:[#allocation4 + $0x1c] sm:$0xf]
        %v497 = vld [vmem:[#allocation4 + $0x20] sm:$0xf]
        %v498 = vld [vmem:[#allocation4 + $0x24] sm:$0xf]
        %v499 = vld [vmem:[#allocation4 + $0x28] sm:$0xf]
        %v500 = vld [vmem:[#allocation4 + $0x2c] sm:$0xf]
        %v501 = vld [vmem:[#allocation4 + $0x30] sm:$0xf]
        %v502 = vld [vmem:[#allocation4 + $0x34] sm:$0xf]
        %v503 = vld [vmem:[#allocation4 + $0x38] sm:$0xf]
        %v504 = vld [vmem:[#allocation4 + $0x3c] sm:$0xf]
        %v505 = vpack.c.bf16 %v430, %v427
        %v506 = vpack.c.bf16 %v438, %v435
        %v507 = vpack.c.bf16 %v446, %v443
        %v508 = vpack.c.bf16 %v454, %v451
        %v509 = vpack.c.bf16 %v462, %v459
        %v510 = vpack.c.bf16 %v470, %v467
        %v511 = vpack.c.bf16 %v478, %v475
        %v512 = vpack.c.bf16 %v486, %v483
        %v513 = vld [vmem:[%s243] sm:$0x1]
        %v515 = vlaneseq
        %v516 = vshrl.u32 %v515, 7
        %v517 = vsub.s32 0, %v516
        %v518 = vrot.slane %v513, %v517
        %v536 = vunpack.c.l.b16 %v489
        %v537 = vunpack.c.l.b16 %v490
        %v538 = vunpack.c.l.b16 %v491
        %v539 = vunpack.c.l.b16 %v492
        %v540 = vunpack.c.l.b16 %v493
        %v541 = vunpack.c.l.b16 %v494
        %v542 = vunpack.c.l.b16 %v495
        %v543 = vunpack.c.l.b16 %v496
        %v544 = vunpack.c.l.b16 %v497
        %v545 = vunpack.c.l.b16 %v498
        %v546 = vunpack.c.l.b16 %v499
        %v547 = vunpack.c.l.b16 %v500
        %v548 = vunpack.c.l.b16 %v501
        %v549 = vunpack.c.l.b16 %v502
        %v550 = vunpack.c.l.b16 %v503
        %v551 = vunpack.c.l.b16 %v504
        %v552 = vpack.c.b16 %v537, %v536
        %v553 = vpack.c.b16 %v539, %v538
        %v554 = vpack.c.b16 %v541, %v540
        %v555 = vpack.c.b16 %v543, %v542
        %v556 = vpack.c.b16 %v545, %v544
        %v557 = vpack.c.b16 %v547, %v546
        %v558 = vpack.c.b16 %v549, %v548
        %v559 = vpack.c.b16 %v551, %v550
        %568 = vmatprep.subr.bf16.mxu0 0
        %569 = vmatpush1.bf16.msra.mxu0 %v505
        %570 = vmatprep.subr.bf16.mxu0 0
        %571 = vmatpush1.bf16.msra.mxu0 %v506
        %572 = vmatprep.subr.bf16.mxu0 0
        %573 = vmatpush1.bf16.msra.mxu0 %v507
        %574 = vmatprep.subr.bf16.mxu0 0
        %575 = vmatpush1.bf16.msra.mxu0 %v508
        %576 = vmatprep.subr.bf16.mxu0 0
        %577 = vmatpush1.bf16.msra.mxu0 %v509
        %578 = vmatprep.subr.bf16.mxu0 0
        %579 = vmatpush1.bf16.msra.mxu0 %v510
        %580 = vmatprep.subr.bf16.mxu0 0
        %581 = vmatpush1.bf16.msra.mxu0 %v511
        %582 = vmatprep.subr.bf16.mxu0 0
        %583 = vmatpush1.bf16.msra.mxu0 %v512
        %584 = vmatprep.subr.bf16.mxu0 0
        %585 = vmatpush1.bf16.msra.mxu0 0
        %586 = vmatprep.subr.bf16.mxu0 0
        %587 = vmatpush1.bf16.msra.mxu0 0
        %588 = vmatprep.subr.bf16.mxu0 0
        %589 = vmatpush1.bf16.msra.mxu0 0
        %590 = vmatprep.subr.bf16.mxu0 0
        %591 = vmatpush1.bf16.msra.mxu0 0
        %592 = vmatprep.subr.bf16.mxu0 0
        %593 = vmatpush1.bf16.msra.mxu0 0
        %594 = vmatprep.subr.bf16.mxu0 0
        %595 = vmatpush1.bf16.msra.mxu0 0
        %596 = vmatprep.subr.bf16.mxu0 0
        %597 = vmatpush1.bf16.msra.mxu0 0
        %598 = vmatprep.subr.bf16.mxu0 0
        %599 = vmatpush1.bf16.msra.mxu0 0
        %600 = vmatprep.mubr.bf16.mxu0 0
        %601 = vmatmul.mubr.bf16.gmra.mrb[0].mxu0 %v552
        %v602 = vpop.f32.mrb[0].mxu0
        %v603 = vadd.f32 %v518, %v602
        %v604 = vpop.f32.mrb[0].mxu0
        %v605 = vpop.f32.mrb[0].mxu0
        %v606 = vadd.f32 %v518, %v605
        %v607 = vpop.f32.mrb[0].mxu0
        %608 = vmatprep.mubr.bf16.mxu0 0
        %609 = vmatmul.mubr.bf16.gmra.mrb[0].mxu0 %v553
        %v610 = vpop.f32.mrb[0].mxu0
        %v611 = vadd.f32 %v518, %v610
        %v612 = vpop.f32.mrb[0].mxu0
        %v613 = vpop.f32.mrb[0].mxu0
        %v614 = vadd.f32 %v518, %v613
        %v615 = vpop.f32.mrb[0].mxu0
        %616 = vmatprep.mubr.bf16.mxu0 0
        %617 = vmatmul.mubr.bf16.gmra.mrb[0].mxu0 %v554
        %v618 = vpop.f32.mrb[0].mxu0
        %v619 = vadd.f32 %v518, %v618
        %v620 = vpop.f32.mrb[0].mxu0
        %v621 = vpop.f32.mrb[0].mxu0
        %v622 = vadd.f32 %v518, %v621
        %v623 = vpop.f32.mrb[0].mxu0
        %624 = vmatprep.mubr.bf16.mxu0 0
        %625 = vmatmul.mubr.bf16.gmra.mrb[0].mxu0 %v555
        %v626 = vpop.f32.mrb[0].mxu0
        %v627 = vadd.f32 %v518, %v626
        %v628 = vpop.f32.mrb[0].mxu0
        %v629 = vpop.f32.mrb[0].mxu0
        %v630 = vadd.f32 %v518, %v629
        %v631 = vpop.f32.mrb[0].mxu0
        %632 = vmatprep.mubr.bf16.mxu0 0
        %633 = vmatmul.mubr.bf16.gmra.mrb[0].mxu0 %v556
        %v634 = vpop.f32.mrb[0].mxu0
        %v635 = vadd.f32 %v518, %v634
        %v636 = vpop.f32.mrb[0].mxu0
        %v637 = vpop.f32.mrb[0].mxu0
        %v638 = vadd.f32 %v518, %v637
        %v639 = vpop.f32.mrb[0].mxu0
        %640 = vmatprep.mubr.bf16.mxu0 0
        %641 = vmatmul.mubr.bf16.gmra.mrb[0].mxu0 %v557
        %v642 = vpop.f32.mrb[0].mxu0
        %v643 = vadd.f32 %v518, %v642
        %v644 = vpop.f32.mrb[0].mxu0
        %v645 = vpop.f32.mrb[0].mxu0
        %v646 = vadd.f32 %v518, %v645
        %v647 = vpop.f32.mrb[0].mxu0
        %648 = vmatprep.mubr.bf16.mxu0 0
        %649 = vmatmul.mubr.bf16.gmra.mrb[0].mxu0 %v558
        %v650 = vpop.f32.mrb[0].mxu0
        %v651 = vadd.f32 %v518, %v650
        %v652 = vpop.f32.mrb[0].mxu0
        %v653 = vpop.f32.mrb[0].mxu0
        %v654 = vadd.f32 %v518, %v653
        %v655 = vpop.f32.mrb[0].mxu0
        %656 = vmatprep.mubr.bf16.mxu0 0
        %657 = vmatmul.mubr.bf16.gmra.mrb[0].mxu0 %v559
        %v658 = vpop.f32.mrb[0].mxu0
        %v659 = vadd.f32 %v518, %v658
        %v660 = vpop.f32.mrb[0].mxu0
        %v661 = vpop.f32.mrb[0].mxu0
        %v662 = vadd.f32 %v518, %v661
        %v663 = vpop.f32.mrb[0].mxu0
        %664 = vdwg.mxu0
        %v665 = vmax.f32 %v603, 0.0
        %v666 = vmax.f32 %v606, 0.0
        %v667 = vmax.f32 %v611, 0.0
        %v668 = vmax.f32 %v614, 0.0
        %v669 = vmax.f32 %v619, 0.0
        %v670 = vmax.f32 %v622, 0.0
        %v671 = vmax.f32 %v627, 0.0
        %v672 = vmax.f32 %v630, 0.0
        %v673 = vmax.f32 %v635, 0.0
        %v674 = vmax.f32 %v638, 0.0
        %v675 = vmax.f32 %v643, 0.0
        %v676 = vmax.f32 %v646, 0.0
        %v677 = vmax.f32 %v651, 0.0
        %v678 = vmax.f32 %v654, 0.0
        %v679 = vmax.f32 %v659, 0.0
        %v680 = vmax.f32 %v662, 0.0
        %s681 = sld [smem:[#allocation3 + %s23]]
        %p682 = scmp.ne.s32.totalorder %s681, 0
        // Predicated region
        $region57: #{tpu_custom_call.1} parent=35 // pred_check
          %p683 = pneg %p682
        $region58: #{tpu_custom_call.1} parent=35 // pred_check_branch
          %685 = sbr.rel (%p683) target = $region60
        $region59: #{tpu_custom_call.1} parent=35 // pred_region
          %v686 = vadd.f32 %v665, %v304
          %v687 = vadd.f32 %v666, %v305
          %v688 = vadd.f32 %v667, %v306
          %v689 = vadd.f32 %v668, %v307
          %v690 = vadd.f32 %v669, %v308
          %v691 = vadd.f32 %v670, %v309
          %v692 = vadd.f32 %v671, %v310
          %v693 = vadd.f32 %v672, %v311
          %v694 = vadd.f32 %v673, %v312
          %v695 = vadd.f32 %v674, %v313
          %v696 = vadd.f32 %v675, %v314
          %v697 = vadd.f32 %v676, %v315
          %v698 = vadd.f32 %v677, %v316
          %v699 = vadd.f32 %v678, %v317
          %v700 = vadd.f32 %v679, %v318
          %v701 = vadd.f32 %v680, %v319
          %702 = vst [vmem:[#allocation11] sm:$0xff] %v686
          %703 = vst [vmem:[#allocation11 + $0x8] sm:$0xff] %v687
          %704 = vst [vmem:[#allocation11 + $0x10] sm:$0xff] %v688
          %705 = vst [vmem:[#allocation11 + $0x18] sm:$0xff] %v689
          %706 = vst [vmem:[#allocation11 + $0x20] sm:$0xff] %v690
          %707 = vst [vmem:[#allocation11 + $0x28] sm:$0xff] %v691
          %708 = vst [vmem:[#allocation11 + $0x30] sm:$0xff] %v692
          %709 = vst [vmem:[#allocation11 + $0x38] sm:$0xff] %v693
          %710 = vst [vmem:[#allocation11 + $0x40] sm:$0xff] %v694
          %711 = vst [vmem:[#allocation11 + $0x48] sm:$0xff] %v695
          %712 = vst [vmem:[#allocation11 + $0x50] sm:$0xff] %v696
          %713 = vst [vmem:[#allocation11 + $0x58] sm:$0xff] %v697
          %714 = vst [vmem:[#allocation11 + $0x60] sm:$0xff] %v698
          %715 = vst [vmem:[#allocation11 + $0x68] sm:$0xff] %v699
          %716 = vst [vmem:[#allocation11 + $0x70] sm:$0xff] %v700
          %717 = vst [vmem:[#allocation11 + $0x78] sm:$0xff] %v701
        $region60: #{tpu_custom_call.1} parent=35 // pred_fallthru
          _
        %s718 = sld [smem:[#allocation3 + %s23]]
        %p719 = scmp.eq.s32.totalorder %s718, 0
        // Predicated region
        $region61: #{tpu_custom_call.1} parent=35 // pred_check
          %p720 = pneg %p719
        $region62: #{tpu_custom_call.1} parent=35 // pred_check_branch
          %722 = sbr.rel (%p720) target = $region64
        $region63: #{tpu_custom_call.1} parent=35 // pred_region
          %723 = vst [vmem:[#allocation11] sm:$0xff] %v665
          %724 = vst [vmem:[#allocation11 + $0x8] sm:$0xff] %v666
          %725 = vst [vmem:[#allocation11 + $0x10] sm:$0xff] %v667
          %726 = vst [vmem:[#allocation11 + $0x18] sm:$0xff] %v668
          %727 = vst [vmem:[#allocation11 + $0x20] sm:$0xff] %v669
          %728 = vst [vmem:[#allocation11 + $0x28] sm:$0xff] %v670
          %729 = vst [vmem:[#allocation11 + $0x30] sm:$0xff] %v671
          %730 = vst [vmem:[#allocation11 + $0x38] sm:$0xff] %v672
          %731 = vst [vmem:[#allocation11 + $0x40] sm:$0xff] %v673
          %732 = vst [vmem:[#allocation11 + $0x48] sm:$0xff] %v674
          %733 = vst [vmem:[#allocation11 + $0x50] sm:$0xff] %v675
          %734 = vst [vmem:[#allocation11 + $0x58] sm:$0xff] %v676
          %735 = vst [vmem:[#allocation11 + $0x60] sm:$0xff] %v677
          %736 = vst [vmem:[#allocation11 + $0x68] sm:$0xff] %v678
          %737 = vst [vmem:[#allocation11 + $0x70] sm:$0xff] %v679
          %738 = vst [vmem:[#allocation11 + $0x78] sm:$0xff] %v680
        $region64: #{tpu_custom_call.1} parent=35 // pred_fallthru
          _
        // Predicated region
        $region65: #{tpu_custom_call.1} parent=35 // pred_check
          %p739 = pneg %p130
        $region66: #{tpu_custom_call.1} parent=35 // pred_check_branch
          %741 = sbr.rel (%p739) target = $region68
        $region67: #{tpu_custom_call.1} parent=35 // pred_region
          %s743 = ssub.s32 2048, 2048
          %744 = vsyncadd [#allocation6], %s743
          %s745 = sshll.u32 [#allocation11], 4
          %s746 = int_to_ptr.vmem [resolvable:$true] %s745
          %751 = dma.vmem_to_hbm [thread:$0]  %s746, 2048, %s5, [#allocation6], 128, 128, 8
        $region68: #{tpu_custom_call.1} parent=35 // pred_fallthru
          _
        // Predicated region
        $region69: #{tpu_custom_call.1} parent=35 // pred_check
          %p752 = pneg %p130
        $region70: #{tpu_custom_call.1} parent=35 // pred_check_branch
          %754 = sbr.rel (%p752) target = $region72
        $region71: #{tpu_custom_call.1} parent=35 // pred_region
          %755 = dma.done [#allocation6], 2048
        $region72: #{tpu_custom_call.1} parent=35 // pred_fallthru
          _
      $region36: #{tpu_custom_call.1} parent=5 // pred_fallthru
        _
      %p756 = scmp.le.s32.totalorder 2, %s18
      // Predicated region
      $region73: #{tpu_custom_call.1} parent=5 // pred_check
        %p757 = pneg %p756
      $region74: #{tpu_custom_call.1} parent=5 // pred_check_branch
        %759 = sbr.rel (%p757) target = $region76
      $region75: #{tpu_custom_call.1} parent=5 // pred_region
        %s760 = ssub.s32 %s18, 2
      $region76: #{tpu_custom_call.1} parent=5 // pred_fallthru
        _
    $region6: #{tpu_custom_call.1} parent=1 // loop_footer
      %s22 = sadd.s32 1, %s18
    $region7: #{tpu_custom_call.1} parent=1 // loop_footer_branch
      %17 = sbr.rel target = $region3
    $region8: #{tpu_custom_call.1} parent=1 // loop_exit
      _
    %761 = vsyncpa [#allocation5], 1
    %s762 = scalar_lea.sflag [#allocation5], 1
    %763 = vsyncpa %s762, 1
    %764 = vsyncpa [#allocation8], 1
    %765 = vsyncpa [#allocation6], 1
    %s766 = scalar_lea.sflag [#allocation6], 1
    %767 = vsyncpa %s766, 1

</llo_original>
